<compile_context>
chip_gen: v7x
topology: tpu7x:2x2x1
jax: 0.10.0
libtpu: 0.0.40
codegen_flags: <defaults>
</compile_context>

<pallas_src>
from functools import partial

import jax
import jax.numpy as jnp
from jax.experimental import pallas as pl
from jax.experimental.pallas import tpu as pltpu


_VMEM = pl.BlockSpec(memory_space=pltpu.MemorySpace.VMEM)
_SMEM = pl.BlockSpec(memory_space=pltpu.MemorySpace.SMEM)
_C_PAD = 128          # pad class dim to one full lane width -> unmasked stores
_NEG_BIG = -1e9       # bias of padded (fake) classes; exp(-1e9 - m) == 0 in f32
_W_DTYPE = jnp.bfloat16   # matmul operand dtype (accumulation is always f32)


def _round_up(x, m):
    return max(m, -(-x // m) * m)


# ----------------------------- fused Pallas kernel -----------------------------

def _tree_kernel(lchild_ref, rchild_ref,                 # SMEM int32 (n_pad,)
                 labels_ref, leaf_x_ref,                 # VMEM (n_pad,1) i32, (n_pad,inp) bf16
                 leaf_w_ref, leaf_b_ref,                 # VMEM (inp,3H) bf16, (1,3H) f32
                 nl_wl_ref, nl_wr_ref, nl_b_ref,         # VMEM (H,5H) bf16 x2, (1,5H) f32
                 score_w_ref, score_b_ref,               # VMEM (H,Cp) bf16, (1,Cp) f32
                 scores_ref, loss_ref,                   # out: (n_pad,Cp) f32, (1,1) f32
                 c_state, h_state,                       # scratch: (n_pad,H) f32
                 lh_buf, rh_buf, lc_buf, rc_buf,         # scratch: (lvl_pad,H) f32
                 *, level_bounds):
    H = nl_wl_ref.shape[0]

    # Zero the level staging buffers once so discarded pad rows stay finite.
    lh_buf[...] = jnp.zeros_like(lh_buf)
    rh_buf[...] = jnp.zeros_like(rh_buf)
    lc_buf[...] = jnp.zeros_like(lc_buf)
    rc_buf[...] = jnp.zeros_like(rc_buf)

    # ---- Phase 1: ALL leaves in one batched MXU matmul.  Gate layout
    #      [inp|out|upd] -> one contiguous sigmoid (2H lanes) + one tanh. ----
    z = (jnp.dot(leaf_x_ref[...], leaf_w_ref[...],
                 preferred_element_type=jnp.float32) + leaf_b_ref[...])
    sg = jax.nn.sigmoid(z[:, :2 * H])
    ug = jnp.tanh(z[:, 2 * H:3 * H])
    cell = sg[:, :H] * ug
    # NOTE: the reference leaf module uses sigmoid(cell_state), not tanh.
    hidd = sg[:, H:2 * H] * jax.nn.sigmoid(cell)
    c_state[...] = cell            # internal-node rows are overwritten below
    h_state[...] = hidd

    # ---- Phase 2: internal nodes, level by level.  Children are gathered with
    #      O(H) dynamic-row reads; one (level, H) @ (H, 5H) matmul per level;
    #      parent states written back as one contiguous block. ----
    nl_wl = nl_wl_ref[...]
    nl_wr = nl_wr_ref[...]
    nl_b = nl_b_ref[...]
    for (start, size) in level_bounds:            # static loop: tree depth
        size_pad = _round_up(size, 8)

        def gather(i, carry, start=start):
            nid = start + i
            lc = lchild_ref[nid]
            rc = rchild_ref[nid]
            lh_buf[pl.ds(i, 1), :] = h_state[pl.ds(lc, 1), :]
            rh_buf[pl.ds(i, 1), :] = h_state[pl.ds(rc, 1), :]
            lc_buf[pl.ds(i, 1), :] = c_state[pl.ds(lc, 1), :]
            rc_buf[pl.ds(i, 1), :] = c_state[pl.ds(rc, 1), :]
            return carry

        jax.lax.fori_loop(0, size, gather, 0, unroll=min(8, size))

        lh = lh_buf[:size_pad, :].astype(nl_wl.dtype)
        rh = rh_buf[:size_pad, :].astype(nl_wr.dtype)
        zz = (jnp.dot(lh, nl_wl, preferred_element_type=jnp.float32)
              + jnp.dot(rh, nl_wr, preferred_element_type=jnp.float32)
              + nl_b)
        # Gate layout [inp | out | fo_l | fo_r | upd]: one contiguous sigmoid
        # over 4H lanes + one tanh over the last H lanes.
        sgz = jax.nn.sigmoid(zz[:, :4 * H])
        ugz = jnp.tanh(zz[:, 4 * H:5 * H])
        cell = (sgz[:, :H] * ugz
                + sgz[:, 2 * H:3 * H] * lc_buf[:size_pad, :]
                + sgz[:, 3 * H:4 * H] * rc_buf[:size_pad, :])
        hidd = sgz[:, H:2 * H] * jnp.tanh(cell)
        # Node ids inside a level are contiguous -> static block scatter-back.
        c_state[start:start + size, :] = cell[:size, :]
        h_state[start:start + size, :] = hidd[:size, :]

    # ---- Phase 3: one batched score matmul + f32 log-softmax + NLL loss.
    #      Class dim padded to 128 lanes (padded bias = -1e9 -> exp == 0). ----
    zs = (jnp.dot(h_state[...].astype(score_w_ref.dtype), score_w_ref[...],
                  preferred_element_type=jnp.float32) + score_b_ref[...])
    m = jnp.max(zs, axis=-1, keepdims=True)
    lse = m + jnp.log(jnp.sum(jnp.exp(zs - m), axis=-1, keepdims=True))
    logp = zs - lse
    scores_ref[...] = logp
    # NLL over labeled nodes: labels holds the class id, -1 = unlabeled/pad.
    col = jax.lax.broadcasted_iota(jnp.int32, logp.shape, 1)
    onehot = col == labels_ref[...]
    loss_ref[...] = -jnp.sum(jnp.where(onehot, logp, 0.0), keepdims=True)


# ----------------------------- parameters -----------------------------

def init_params(key, inp_dim, hid_dim, num_classes, c_pad=_C_PAD, w_dtype=_W_DTYPE):
    ks = jax.random.split(key, 4)

    def lin(k, fan_in, fan_out):
        bound = 1.0 / float(fan_in) ** 0.5
        kw, kb = jax.random.split(k)
        w = jax.random.uniform(kw, (fan_in, fan_out), jnp.float32, -bound, bound)
        b = jax.random.uniform(kb, (1, fan_out), jnp.float32, -bound, bound)
        return w, b

    # Leaf gate layout [inp|out|upd]; non-leaf [inp|out|fo_l|fo_r|upd]
    # (all sigmoid gates contiguous first, tanh'd update gate last).
    leaf_w, leaf_b = lin(ks[0], inp_dim, 3 * hid_dim)
    nl_wl, nl_bl = lin(ks[1], hid_dim, 5 * hid_dim)
    nl_wr, nl_br = lin(ks[2], hid_dim, 5 * hid_dim)
    sw, sb = lin(ks[3], hid_dim, num_classes)
    score_w = jnp.zeros((hid_dim, c_pad), jnp.float32).at[:, :num_classes].set(sw)
    score_b = jnp.full((1, c_pad), _NEG_BIG, jnp.float32).at[:, :num_classes].set(sb)
    return {
        "leaf_w": leaf_w.astype(w_dtype), "leaf_b": leaf_b,
        "nl_wl": nl_wl.astype(w_dtype), "nl_wr": nl_wr.astype(w_dtype),
        "nl_b": nl_bl + nl_br,
        "score_w": score_w.astype(w_dtype), "score_b": score_b,
    }


# ----------------------------- tree structure & schedule -----------------------------

class Tree:
    def __init__(self, idx=None, label=None, children=()):
        self.idx = idx                 # 1-based leaf word index (leaves only)
        self.label = label
        self.children = list(children)
        self.num_child = len(self.children)
        self.height = None
        self.node_id = None
        self.output = None


def build_schedule(root):
    """Order nodes leaves-first, then internal nodes grouped by height so that
    children strictly precede parents and each level is contiguous."""
    leaves, internals = [], []

    def collect(node):
        if node.num_child == 0:
            node.height = 0
            leaves.append(node)
        else:
            for child in node.children:
                collect(child)
            node.height = 1 + max(c.height for c in node.children)
            internals.append(node)

    collect(root)
    internals.sort(key=lambda n: n.height)        # stable: group by height
    nodes = leaves + internals
    for k, n in enumerate(nodes):
        n.node_id = k
    num_leaves, num_nodes = len(leaves), len(nodes)
    # TODO(synk): for a real dataset, bucket n_pad / level shapes to a few sizes
    # so trees of similar shape share one compiled kernel.
    n_pad = _round_up(num_nodes, 8)

    level_bounds = []
    pos, i = num_leaves, 0
    while i < len(internals):
        j = i
        while j < len(internals) and internals[j].height == internals[i].height:
            j += 1
        level_bounds.append((pos, j - i))
        pos += j - i
        i = j
    level_bounds = tuple(level_bounds)

    lchild = [0] * n_pad
    rchild = [0] * n_pad
    for n in internals:
        lchild[n.node_id] = n.children[0].node_id
        rchild[n.node_id] = n.children[1].node_id
    labels = [-1] * n_pad
    for n in nodes:
        if n.label is not None:
            labels[n.node_id] = int(n.label)
    # Pad the leaf-word gather list to n_pad (pad rows are overwritten / masked).
    leaf_words = [n.idx - 1 for n in leaves] + [0] * (n_pad - num_leaves)

    return (jnp.array(lchild, jnp.int32),
            jnp.array(rchild, jnp.int32),
            jnp.array(labels, jnp.int32).reshape(n_pad, 1),
            jnp.array(leaf_words, jnp.int32),
            level_bounds, num_leaves, num_nodes, nodes)


# ----------------------------- forward wrappers -----------------------------

@partial(jax.jit, static_argnames=("level_bounds",))
def _forward_impl(embeddings, params, lchild, rchild, labels, leaf_words,
                  level_bounds):
    n_pad = lchild.shape[0]
    c_pad = params["score_b"].shape[-1]
    H = params["nl_wl"].shape[0]
    # One batched embedding gather for all rows (pad rows index word 0 but are
    # either overwritten by Phase 2 or masked out of the loss).
    leaf_x = jnp.take(embeddings, leaf_words, axis=0).astype(params["leaf_w"].dtype)

    max_level = max((s for _, s in level_bounds), default=1)
    lvl_pad = _round_up(max_level, 8)

    kernel = partial(_tree_kernel, level_bounds=level_bounds)
    scores, loss = pl.pallas_call(
        kernel,
        out_shape=(jax.ShapeDtypeStruct((n_pad, c_pad), jnp.float32),
                   jax.ShapeDtypeStruct((1, 1), jnp.float32)),
        in_specs=[_SMEM, _SMEM,                      # lchild, rchild
                  _VMEM, _VMEM,                      # labels, leaf_x
                  _VMEM, _VMEM,                      # leaf_w, leaf_b
                  _VMEM, _VMEM, _VMEM,               # nl_wl, nl_wr, nl_b
                  _VMEM, _VMEM],                     # score_w, score_b
        out_specs=(_VMEM, _VMEM),
        scratch_shapes=[pltpu.VMEM((n_pad, H), jnp.float32),      # c_state
                        pltpu.VMEM((n_pad, H), jnp.float32),      # h_state
                        pltpu.VMEM((lvl_pad, H), jnp.float32),    # lh_buf
                        pltpu.VMEM((lvl_pad, H), jnp.float32),    # rh_buf
                        pltpu.VMEM((lvl_pad, H), jnp.float32),    # lc_buf
                        pltpu.VMEM((lvl_pad, H), jnp.float32)],   # rc_buf
    )(lchild, rchild, labels, leaf_x,
      params["leaf_w"], params["leaf_b"],
      params["nl_wl"], params["nl_wr"], params["nl_b"],
      params["score_w"], params["score_b"])
    return scores, loss[0, 0]


def const_btree_lstm_forward(root, embeddings, params, num_classes):
    """Mirrors binary_tree_lstm.forward + const_btree_lstm.forward (eval mode)."""
    # TODO(synk): nn.Dropout(p=0.5) is stochastic in train mode; applied as identity (eval mode).
    (lchild, rchild, labels, leaf_words, level_bounds,
     num_leaves, num_nodes, nodes) = build_schedule(root)
    scores, loss = _forward_impl(embeddings, params, lchild, rchild, labels,
                                 leaf_words, level_bounds=level_bounds)
    for n in nodes:   # parity with the reference: every node gets its output
        n.output = scores[n.node_id:n.node_id + 1, :num_classes]
    root_out = scores[num_nodes - 1:num_nodes, :num_classes]   # root is last node
    return root_out, loss


# ----------------------------- pure-JAX reference (for validation) -----------------------------

def _mm(x, w, b):
    return jnp.dot(x.astype(w.dtype), w, preferred_element_type=jnp.float32) + b


def _ref_node(node, embeddings, params, H):
    if node.num_child == 0:
        x = embeddings[node.idx - 1][None, :]
        z = _mm(x, params["leaf_w"], params["leaf_b"])
        ig = jax.nn.sigmoid(z[:, :H]); og = jax.nn.sigmoid(z[:, H:2 * H])
        ug = jnp.tanh(z[:, 2 * H:3 * H])
        c = ig * ug
        h = og * jax.nn.sigmoid(c)
        loss = jnp.zeros((), jnp.float32)
    else:
        (lc, lh), l_loss, _ = _ref_node(node.children[0], embeddings, params, H)
        (rc, rh), r_loss, _ = _ref_node(node.children[1], embeddings, params, H)
        z = (jnp.dot(lh.astype(params["nl_wl"].dtype), params["nl_wl"],
                     preferred_element_type=jnp.float32)
             + jnp.dot(rh.astype(params["nl_wr"].dtype), params["nl_wr"],
                       preferred_element_type=jnp.float32)
             + params["nl_b"])
        ig = jax.nn.sigmoid(z[:, :H]); og = jax.nn.sigmoid(z[:, H:2 * H])
        fl = jax.nn.sigmoid(z[:, 2 * H:3 * H]); fr = jax.nn.sigmoid(z[:, 3 * H:4 * H])
        ug = jnp.tanh(z[:, 4 * H:5 * H])
        c = ig * ug + fl * lc + fr * rc
        h = og * jnp.tanh(c)
        loss = l_loss + r_loss
    logp = jax.nn.log_softmax(_mm(h, params["score_w"], params["score_b"]), axis=-1)
    if node.label is not None:
        loss = loss + (-logp[0, node.label])
    return (c, h), loss, logp


# ----------------------------- main -----------------------------

if __name__ == "__main__":
    inp_dim, hid_dim, num_classes = 16, 128, 3     # fine_grain=False -> 3 classes
    num_words = 4

    key = jax.random.PRNGKey(0)
    k_emb, k_par = jax.random.split(key)
    embeddings = jax.random.normal(k_emb, (num_words, inp_dim), jnp.float32)
    params = init_params(k_par, inp_dim, hid_dim, num_classes)

    # Full binary constituency tree over 4 leaves: ((w1 w2)(w3 w4))
    leaf1 = Tree(idx=1, label=0)
    leaf2 = Tree(idx=2, label=1)
    leaf3 = Tree(idx=3, label=2)
    leaf4 = Tree(idx=4, label=1)
    left = Tree(label=2, children=(leaf1, leaf2))
    right = Tree(label=0, children=(leaf3, leaf4))
    root = Tree(label=1, children=(left, right))

    tree_output, loss = const_btree_lstm_forward(root, embeddings, params, num_classes)
    jax.block_until_ready((tree_output, loss))

    # Validate against a pure-JAX reference of the same math (same bf16 casts).
    (_, _), ref_loss, ref_logp = _ref_node(root, embeddings, params, hid_dim)
    assert tree_output.shape == (1, num_classes)
    assert bool(jnp.isfinite(loss))
    assert jnp.allclose(loss, ref_loss, atol=1e-2, rtol=1e-2), (loss, ref_loss)
    assert jnp.allclose(tree_output, ref_logp[:, :num_classes], atol=1e-2, rtol=1e-2)
    print("KERNEL_OK")
</pallas_src>

<mosaic_0001>
module attributes {stable_mosaic.version = 11 : i64} {
  func.func @_tree_kernel(%arg0: memref<8xi32, #tpu.memory_space<smem>>, %arg1: memref<8xi32, #tpu.memory_space<smem>>, %arg2: memref<8x1xi32, #tpu.memory_space<vmem>>, %arg3: memref<8x16xbf16, #tpu.memory_space<vmem>>, %arg4: memref<16x384xbf16, #tpu.memory_space<vmem>>, %arg5: memref<1x384xf32, #tpu.memory_space<vmem>>, %arg6: memref<128x640xbf16, #tpu.memory_space<vmem>>, %arg7: memref<128x640xbf16, #tpu.memory_space<vmem>>, %arg8: memref<1x640xf32, #tpu.memory_space<vmem>>, %arg9: memref<128x128xbf16, #tpu.memory_space<vmem>>, %arg10: memref<1x128xf32, #tpu.memory_space<vmem>>, %arg11: memref<8x128xf32, #tpu.memory_space<vmem>>, %arg12: memref<1x1xf32, #tpu.memory_space<vmem>>, %arg13: memref<8x128xf32, #tpu.memory_space<vmem>>, %arg14: memref<8x128xf32, #tpu.memory_space<vmem>>, %arg15: memref<8x128xf32, #tpu.memory_space<vmem>>, %arg16: memref<8x128xf32, #tpu.memory_space<vmem>>, %arg17: memref<8x128xf32, #tpu.memory_space<vmem>>, %arg18: memref<8x128xf32, #tpu.memory_space<vmem>>) attributes {dimension_semantics = [], scalar_prefetch = 0 : i64, scratch_operands = 6 : i64, tpu.core_type = #tpu.core_type<tc>} {
    %cst = arith.constant 0.000000e+00 : f32
    %0 = vector.broadcast %cst : f32 to vector<8x128xf32>
    %c0 = arith.constant 0 : index
    %c0_0 = arith.constant 0 : index
    %1 = vector.load %arg15[%c0, %c0_0] : memref<8x128xf32, #tpu.memory_space<vmem>>, vector<8x128xf32>
    tpu.vector_store %arg15[%c0, %c0_0], %0 {strides = array<i32>} : memref<8x128xf32, #tpu.memory_space<vmem>>, vector<8x128xf32>,
    %cst_1 = arith.constant 0.000000e+00 : f32
    %2 = vector.broadcast %cst_1 : f32 to vector<8x128xf32>
    %c0_2 = arith.constant 0 : index
    %c0_3 = arith.constant 0 : index
    %3 = vector.load %arg16[%c0_2, %c0_3] : memref<8x128xf32, #tpu.memory_space<vmem>>, vector<8x128xf32>
    tpu.vector_store %arg16[%c0_2, %c0_3], %2 {strides = array<i32>} : memref<8x128xf32, #tpu.memory_space<vmem>>, vector<8x128xf32>,
    %cst_4 = arith.constant 0.000000e+00 : f32
    %4 = vector.broadcast %cst_4 : f32 to vector<8x128xf32>
    %c0_5 = arith.constant 0 : index
    %c0_6 = arith.constant 0 : index
    %5 = vector.load %arg17[%c0_5, %c0_6] : memref<8x128xf32, #tpu.memory_space<vmem>>, vector<8x128xf32>
    tpu.vector_store %arg17[%c0_5, %c0_6], %4 {strides = array<i32>} : memref<8x128xf32, #tpu.memory_space<vmem>>, vector<8x128xf32>,
    %cst_7 = arith.constant 0.000000e+00 : f32
    %6 = vector.broadcast %cst_7 : f32 to vector<8x128xf32>
    %c0_8 = arith.constant 0 : index
    %c0_9 = arith.constant 0 : index
    %7 = vector.load %arg18[%c0_8, %c0_9] : memref<8x128xf32, #tpu.memory_space<vmem>>, vector<8x128xf32>
    tpu.vector_store %arg18[%c0_8, %c0_9], %6 {strides = array<i32>} : memref<8x128xf32, #tpu.memory_space<vmem>>, vector<8x128xf32>,
    %c0_10 = arith.constant 0 : index
    %c0_11 = arith.constant 0 : index
    %8 = vector.load %arg3[%c0_10, %c0_11] : memref<8x16xbf16, #tpu.memory_space<vmem>>, vector<8x16xbf16>
    %c0_12 = arith.constant 0 : index
    %c0_13 = arith.constant 0 : index
    %9 = vector.load %arg4[%c0_12, %c0_13] : memref<16x384xbf16, #tpu.memory_space<vmem>>, vector<16x384xbf16>
    %cst_14 = arith.constant dense<0.000000e+00> : vector<8x384xf32>
    %10 = tpu.matmul %8, %9, %cst_14 {dimension_numbers = #tpu.dot_dimension_numbers<[1], [0], [0], [1], [0, 0, 1, 1], [], []>} : vector<8x16xbf16>, vector<16x384xbf16>, vector<8x384xf32> -> vector<8x384xf32>
    %c0_15 = arith.constant 0 : index
    %c0_16 = arith.constant 0 : index
    %11 = vector.load %arg5[%c0_15, %c0_16] : memref<1x384xf32, #tpu.memory_space<vmem>>, vector<1x384xf32>
    %12 = vector.broadcast %11 : vector<1x384xf32> to vector<8x384xf32>
    %13 = arith.addf %10, %12 : vector<8x384xf32>
    %14 = vector.extract_strided_slice %13 {offsets = [0, 0], sizes = [8, 256], strides = [1, 1]} : vector<8x384xf32> to vector<8x256xf32>
    %15 = arith.negf %14 : vector<8x256xf32>
    %16 = math.exp %15 : vector<8x256xf32>
    %cst_17 = arith.constant 1.000000e+00 : f32
    %17 = vector.broadcast %cst_17 : f32 to vector<8x256xf32>
    %18 = arith.addf %17, %16 : vector<8x256xf32>
    %19 = arith.divf %17, %18 : vector<8x256xf32>
    %20 = vector.extract_strided_slice %13 {offsets = [0, 256], sizes = [8, 128], strides = [1, 1]} : vector<8x384xf32> to vector<8x128xf32>
    %21 = math.tanh %20 : vector<8x128xf32>
    %22 = vector.extract_strided_slice %19 {offsets = [0, 0], sizes = [8, 128], strides = [1, 1]} : vector<8x256xf32> to vector<8x128xf32>
    %23 = arith.mulf %22, %21 : vector<8x128xf32>
    %24 = vector.extract_strided_slice %19 {offsets = [0, 128], sizes = [8, 128], strides = [1, 1]} : vector<8x256xf32> to vector<8x128xf32>
    %25 = arith.negf %23 : vector<8x128xf32>
    %26 = math.exp %25 : vector<8x128xf32>
    %cst_18 = arith.constant 1.000000e+00 : f32
    %27 = vector.broadcast %cst_18 : f32 to vector<8x128xf32>
    %28 = arith.addf %27, %26 : vector<8x128xf32>
    %29 = arith.divf %27, %28 : vector<8x128xf32>
    %30 = arith.mulf %24, %29 : vector<8x128xf32>
    %c0_19 = arith.constant 0 : index
    %c0_20 = arith.constant 0 : index
    %31 = vector.load %arg13[%c0_19, %c0_20] : memref<8x128xf32, #tpu.memory_space<vmem>>, vector<8x128xf32>
    tpu.vector_store %arg13[%c0_19, %c0_20], %23 {strides = array<i32>} : memref<8x128xf32, #tpu.memory_space<vmem>>, vector<8x128xf32>,
    %c0_21 = arith.constant 0 : index
    %c0_22 = arith.constant 0 : index
    %32 = vector.load %arg14[%c0_21, %c0_22] : memref<8x128xf32, #tpu.memory_space<vmem>>, vector<8x128xf32>
    tpu.vector_store %arg14[%c0_21, %c0_22], %30 {strides = array<i32>} : memref<8x128xf32, #tpu.memory_space<vmem>>, vector<8x128xf32>,
    %c0_23 = arith.constant 0 : index
    %c0_24 = arith.constant 0 : index
    %33 = vector.load %arg6[%c0_23, %c0_24] : memref<128x640xbf16, #tpu.memory_space<vmem>>, vector<128x640xbf16>
    %c0_25 = arith.constant 0 : index
    %c0_26 = arith.constant 0 : index
    %34 = vector.load %arg7[%c0_25, %c0_26] : memref<128x640xbf16, #tpu.memory_space<vmem>>, vector<128x640xbf16>
    %c0_27 = arith.constant 0 : index
    %c0_28 = arith.constant 0 : index
    %35 = vector.load %arg8[%c0_27, %c0_28] : memref<1x640xf32, #tpu.memory_space<vmem>>, vector<1x640xf32>
    %c0_i32 = arith.constant 0 : i32
    %c4_i32 = arith.constant 4 : i32
    %36 = arith.addi %c4_i32, %c0_i32 : i32
    %37 = arith.index_cast %36 : i32 to index
    %38 = memref.load %arg0[%37] : memref<8xi32, #tpu.memory_space<smem>>
    %39 = arith.index_cast %36 : i32 to index
    %40 = memref.load %arg1[%39] : memref<8xi32, #tpu.memory_space<smem>>
    %41 = arith.index_cast %38 : i32 to index
    %c0_29 = arith.constant 0 : index
    %42 = vector.load %arg14[%41, %c0_29] : memref<8x128xf32, #tpu.memory_space<vmem>>, vector<1x128xf32>
    %43 = arith.index_cast %c0_i32 : i32 to index
    %c0_30 = arith.constant 0 : index
    %44 = vector.load %arg15[%43, %c0_30] : memref<8x128xf32, #tpu.memory_space<vmem>>, vector<1x128xf32>
    tpu.vector_store %arg15[%43, %c0_30], %42 {strides = array<i32>} : memref<8x128xf32, #tpu.memory_space<vmem>>, vector<1x128xf32>,
    %45 = arith.index_cast %40 : i32 to index
    %c0_31 = arith.constant 0 : index
    %46 = vector.load %arg14[%45, %c0_31] : memref<8x128xf32, #tpu.memory_space<vmem>>, vector<1x128xf32>
    %47 = arith.index_cast %c0_i32 : i32 to index
    %c0_32 = arith.constant 0 : index
    %48 = vector.load %arg16[%47, %c0_32] : memref<8x128xf32, #tpu.memory_space<vmem>>, vector<1x128xf32>
    tpu.vector_store %arg16[%47, %c0_32], %46 {strides = array<i32>} : memref<8x128xf32, #tpu.memory_space<vmem>>, vector<1x128xf32>,
    %49 = arith.index_cast %38 : i32 to index
    %c0_33 = arith.constant 0 : index
    %50 = vector.load %arg13[%49, %c0_33] : memref<8x128xf32, #tpu.memory_space<vmem>>, vector<1x128xf32>
    %51 = arith.index_cast %c0_i32 : i32 to index
    %c0_34 = arith.constant 0 : index
    %52 = vector.load %arg17[%51, %c0_34] : memref<8x128xf32, #tpu.memory_space<vmem>>, vector<1x128xf32>
    tpu.vector_store %arg17[%51, %c0_34], %50 {strides = array<i32>} : memref<8x128xf32, #tpu.memory_space<vmem>>, vector<1x128xf32>,
    %53 = arith.index_cast %40 : i32 to index
    %c0_35 = arith.constant 0 : index
    %54 = vector.load %arg13[%53, %c0_35] : memref<8x128xf32, #tpu.memory_space<vmem>>, vector<1x128xf32>
    %55 = arith.index_cast %c0_i32 : i32 to index
    %c0_36 = arith.constant 0 : index
    %56 = vector.load %arg18[%55, %c0_36] : memref<8x128xf32, #tpu.memory_space<vmem>>, vector<1x128xf32>
    tpu.vector_store %arg18[%55, %c0_36], %54 {strides = array<i32>} : memref<8x128xf32, #tpu.memory_space<vmem>>, vector<1x128xf32>,
    %c1_i32 = arith.constant 1 : i32
    %c4_i32_37 = arith.constant 4 : i32
    %57 = arith.addi %c4_i32_37, %c1_i32 : i32
    %58 = arith.index_cast %57 : i32 to index
    %59 = memref.load %arg0[%58] : memref<8xi32, #tpu.memory_space<smem>>
    %60 = arith.index_cast %57 : i32 to index
    %61 = memref.load %arg1[%60] : memref<8xi32, #tpu.memory_space<smem>>
    %62 = arith.index_cast %59 : i32 to index
    %c0_38 = arith.constant 0 : index
    %63 = vector.load %arg14[%62, %c0_38] : memref<8x128xf32, #tpu.memory_space<vmem>>, vector<1x128xf32>
    %64 = arith.index_cast %c1_i32 : i32 to index
    %c0_39 = arith.constant 0 : index
    %65 = vector.load %arg15[%64, %c0_39] : memref<8x128xf32, #tpu.memory_space<vmem>>, vector<1x128xf32>
    tpu.vector_store %arg15[%64, %c0_39], %63 {strides = array<i32>} : memref<8x128xf32, #tpu.memory_space<vmem>>, vector<1x128xf32>,
    %66 = arith.index_cast %61 : i32 to index
    %c0_40 = arith.constant 0 : index
    %67 = vector.load %arg14[%66, %c0_40] : memref<8x128xf32, #tpu.memory_space<vmem>>, vector<1x128xf32>
    %68 = arith.index_cast %c1_i32 : i32 to index
    %c0_41 = arith.constant 0 : index
    %69 = vector.load %arg16[%68, %c0_41] : memref<8x128xf32, #tpu.memory_space<vmem>>, vector<1x128xf32>
    tpu.vector_store %arg16[%68, %c0_41], %67 {strides = array<i32>} : memref<8x128xf32, #tpu.memory_space<vmem>>, vector<1x128xf32>,
    %70 = arith.index_cast %59 : i32 to index
    %c0_42 = arith.constant 0 : index
    %71 = vector.load %arg13[%70, %c0_42] : memref<8x128xf32, #tpu.memory_space<vmem>>, vector<1x128xf32>
    %72 = arith.index_cast %c1_i32 : i32 to index
    %c0_43 = arith.constant 0 : index
    %73 = vector.load %arg17[%72, %c0_43] : memref<8x128xf32, #tpu.memory_space<vmem>>, vector<1x128xf32>
    tpu.vector_store %arg17[%72, %c0_43], %71 {strides = array<i32>} : memref<8x128xf32, #tpu.memory_space<vmem>>, vector<1x128xf32>,
    %74 = arith.index_cast %61 : i32 to index
    %c0_44 = arith.constant 0 : index
    %75 = vector.load %arg13[%74, %c0_44] : memref<8x128xf32, #tpu.memory_space<vmem>>, vector<1x128xf32>
    %76 = arith.index_cast %c1_i32 : i32 to index
    %c0_45 = arith.constant 0 : index
    %77 = vector.load %arg18[%76, %c0_45] : memref<8x128xf32, #tpu.memory_space<vmem>>, vector<1x128xf32>
    tpu.vector_store %arg18[%76, %c0_45], %75 {strides = array<i32>} : memref<8x128xf32, #tpu.memory_space<vmem>>, vector<1x128xf32>,
    %c2_i32 = arith.constant 2 : i32
    %c0_46 = arith.constant 0 : index
    %c0_47 = arith.constant 0 : index
    %78 = vector.load %arg15[%c0_46, %c0_47] : memref<8x128xf32, #tpu.memory_space<vmem>>, vector<8x128xf32>
    %79 = arith.truncf %78 : vector<8x128xf32> to vector<8x128xbf16>
    %c0_48 = arith.constant 0 : index
    %c0_49 = arith.constant 0 : index
    %80 = vector.load %arg16[%c0_48, %c0_49] : memref<8x128xf32, #tpu.memory_space<vmem>>, vector<8x128xf32>
    %81 = arith.truncf %80 : vector<8x128xf32> to vector<8x128xbf16>
    %cst_50 = arith.constant dense<0.000000e+00> : vector<8x640xf32>
    %82 = tpu.matmul %79, %33, %cst_50 {dimension_numbers = #tpu.dot_dimension_numbers<[1], [0], [0], [1], [0, 0, 1, 1], [], []>} : vector<8x128xbf16>, vector<128x640xbf16>, vector<8x640xf32> -> vector<8x640xf32>
    %cst_51 = arith.constant dense<0.000000e+00> : vector<8x640xf32>
    %83 = tpu.matmul %81, %34, %cst_51 {dimension_numbers = #tpu.dot_dimension_numbers<[1], [0], [0], [1], [0, 0, 1, 1], [], []>} : vector<8x128xbf16>, vector<128x640xbf16>, vector<8x640xf32> -> vector<8x640xf32>
    %84 = arith.addf %82, %83 : vector<8x640xf32>
    %85 = vector.broadcast %35 : vector<1x640xf32> to vector<8x640xf32>
    %86 = arith.addf %84, %85 : vector<8x640xf32>
    %87 = vector.extract_strided_slice %86 {offsets = [0, 0], sizes = [8, 512], strides = [1, 1]} : vector<8x640xf32> to vector<8x512xf32>
    %88 = arith.negf %87 : vector<8x512xf32>
    %89 = math.exp %88 : vector<8x512xf32>
    %cst_52 = arith.constant 1.000000e+00 : f32
    %90 = vector.broadcast %cst_52 : f32 to vector<8x512xf32>
    %91 = arith.addf %90, %89 : vector<8x512xf32>
    %92 = arith.divf %90, %91 : vector<8x512xf32>
    %93 = vector.extract_strided_slice %86 {offsets = [0, 512], sizes = [8, 128], strides = [1, 1]} : vector<8x640xf32> to vector<8x128xf32>
    %94 = math.tanh %93 : vector<8x128xf32>
    %95 = vector.extract_strided_slice %92 {offsets = [0, 0], sizes = [8, 128], strides = [1, 1]} : vector<8x512xf32> to vector<8x128xf32>
    %96 = arith.mulf %95, %94 : vector<8x128xf32>
    %97 = vector.extract_strided_slice %92 {offsets = [0, 256], sizes = [8, 128], strides = [1, 1]} : vector<8x512xf32> to vector<8x128xf32>
    %c0_53 = arith.constant 0 : index
    %c0_54 = arith.constant 0 : index
    %98 = vector.load %arg17[%c0_53, %c0_54] : memref<8x128xf32, #tpu.memory_space<vmem>>, vector<8x128xf32>
    %99 = arith.mulf %97, %98 : vector<8x128xf32>
    %100 = arith.addf %96, %99 : vector<8x128xf32>
    %101 = vector.extract_strided_slice %92 {offsets = [0, 384], sizes = [8, 128], strides = [1, 1]} : vector<8x512xf32> to vector<8x128xf32>
    %c0_55 = arith.constant 0 : index
    %c0_56 = arith.constant 0 : index
    %102 = vector.load %arg18[%c0_55, %c0_56] : memref<8x128xf32, #tpu.memory_space<vmem>>, vector<8x128xf32>
    %103 = arith.mulf %101, %102 : vector<8x128xf32>
    %104 = arith.addf %100, %103 : vector<8x128xf32>
    %105 = vector.extract_strided_slice %92 {offsets = [0, 128], sizes = [8, 128], strides = [1, 1]} : vector<8x512xf32> to vector<8x128xf32>
    %106 = math.tanh %104 : vector<8x128xf32>
    %107 = arith.mulf %105, %106 : vector<8x128xf32>
    %108 = vector.extract_strided_slice %104 {offsets = [0, 0], sizes = [2, 128], strides = [1, 1]} : vector<8x128xf32> to vector<2x128xf32>
    %c4 = arith.constant 4 : index
    %c0_57 = arith.constant 0 : index
    %109 = vector.load %arg13[%c4, %c0_57] : memref<8x128xf32, #tpu.memory_space<vmem>>, vector<2x128xf32>
    tpu.vector_store %arg13[%c4, %c0_57], %108 {strides = array<i32>} : memref<8x128xf32, #tpu.memory_space<vmem>>, vector<2x128xf32>,
    %110 = vector.extract_strided_slice %107 {offsets = [0, 0], sizes = [2, 128], strides = [1, 1]} : vector<8x128xf32> to vector<2x128xf32>
    %c4_58 = arith.constant 4 : index
    %c0_59 = arith.constant 0 : index
    %111 = vector.load %arg14[%c4_58, %c0_59] : memref<8x128xf32, #tpu.memory_space<vmem>>, vector<2x128xf32>
    tpu.vector_store %arg14[%c4_58, %c0_59], %110 {strides = array<i32>} : memref<8x128xf32, #tpu.memory_space<vmem>>, vector<2x128xf32>,
    %c0_i32_60 = arith.constant 0 : i32
    %c6_i32 = arith.constant 6 : i32
    %112 = arith.addi %c6_i32, %c0_i32_60 : i32
    %113 = arith.index_cast %112 : i32 to index
    %114 = memref.load %arg0[%113] : memref<8xi32, #tpu.memory_space<smem>>
    %115 = arith.index_cast %112 : i32 to index
    %116 = memref.load %arg1[%115] : memref<8xi32, #tpu.memory_space<smem>>
    %117 = arith.index_cast %114 : i32 to index
    %c0_61 = arith.constant 0 : index
    %118 = vector.load %arg14[%117, %c0_61] : memref<8x128xf32, #tpu.memory_space<vmem>>, vector<1x128xf32>
    %119 = arith.index_cast %c0_i32_60 : i32 to index
    %c0_62 = arith.constant 0 : index
    %120 = vector.load %arg15[%119, %c0_62] : memref<8x128xf32, #tpu.memory_space<vmem>>, vector<1x128xf32>
    tpu.vector_store %arg15[%119, %c0_62], %118 {strides = array<i32>} : memref<8x128xf32, #tpu.memory_space<vmem>>, vector<1x128xf32>,
    %121 = arith.index_cast %116 : i32 to index
    %c0_63 = arith.constant 0 : index
    %122 = vector.load %arg14[%121, %c0_63] : memref<8x128xf32, #tpu.memory_space<vmem>>, vector<1x128xf32>
    %123 = arith.index_cast %c0_i32_60 : i32 to index
    %c0_64 = arith.constant 0 : index
    %124 = vector.load %arg16[%123, %c0_64] : memref<8x128xf32, #tpu.memory_space<vmem>>, vector<1x128xf32>
    tpu.vector_store %arg16[%123, %c0_64], %122 {strides = array<i32>} : memref<8x128xf32, #tpu.memory_space<vmem>>, vector<1x128xf32>,
    %125 = arith.index_cast %114 : i32 to index
    %c0_65 = arith.constant 0 : index
    %126 = vector.load %arg13[%125, %c0_65] : memref<8x128xf32, #tpu.memory_space<vmem>>, vector<1x128xf32>
    %127 = arith.index_cast %c0_i32_60 : i32 to index
    %c0_66 = arith.constant 0 : index
    %128 = vector.load %arg17[%127, %c0_66] : memref<8x128xf32, #tpu.memory_space<vmem>>, vector<1x128xf32>
    tpu.vector_store %arg17[%127, %c0_66], %126 {strides = array<i32>} : memref<8x128xf32, #tpu.memory_space<vmem>>, vector<1x128xf32>,
    %129 = arith.index_cast %116 : i32 to index
    %c0_67 = arith.constant 0 : index
    %130 = vector.load %arg13[%129, %c0_67] : memref<8x128xf32, #tpu.memory_space<vmem>>, vector<1x128xf32>
    %131 = arith.index_cast %c0_i32_60 : i32 to index
    %c0_68 = arith.constant 0 : index
    %132 = vector.load %arg18[%131, %c0_68] : memref<8x128xf32, #tpu.memory_space<vmem>>, vector<1x128xf32>
    tpu.vector_store %arg18[%131, %c0_68], %130 {strides = array<i32>} : memref<8x128xf32, #tpu.memory_space<vmem>>, vector<1x128xf32>,
    %c1_i32_69 = arith.constant 1 : i32
    %c0_70 = arith.constant 0 : index
    %c0_71 = arith.constant 0 : index
    %133 = vector.load %arg15[%c0_70, %c0_71] : memref<8x128xf32, #tpu.memory_space<vmem>>, vector<8x128xf32>
    %134 = arith.truncf %133 : vector<8x128xf32> to vector<8x128xbf16>
    %c0_72 = arith.constant 0 : index
    %c0_73 = arith.constant 0 : index
    %135 = vector.load %arg16[%c0_72, %c0_73] : memref<8x128xf32, #tpu.memory_space<vmem>>, vector<8x128xf32>
    %136 = arith.truncf %135 : vector<8x128xf32> to vector<8x128xbf16>
    %cst_74 = arith.constant dense<0.000000e+00> : vector<8x640xf32>
    %137 = tpu.matmul %134, %33, %cst_74 {dimension_numbers = #tpu.dot_dimension_numbers<[1], [0], [0], [1], [0, 0, 1, 1], [], []>} : vector<8x128xbf16>, vector<128x640xbf16>, vector<8x640xf32> -> vector<8x640xf32>
    %cst_75 = arith.constant dense<0.000000e+00> : vector<8x640xf32>
    %138 = tpu.matmul %136, %34, %cst_75 {dimension_numbers = #tpu.dot_dimension_numbers<[1], [0], [0], [1], [0, 0, 1, 1], [], []>} : vector<8x128xbf16>, vector<128x640xbf16>, vector<8x640xf32> -> vector<8x640xf32>
    %139 = arith.addf %137, %138 : vector<8x640xf32>
    %140 = vector.broadcast %35 : vector<1x640xf32> to vector<8x640xf32>
    %141 = arith.addf %139, %140 : vector<8x640xf32>
    %142 = vector.extract_strided_slice %141 {offsets = [0, 0], sizes = [8, 512], strides = [1, 1]} : vector<8x640xf32> to vector<8x512xf32>
    %143 = arith.negf %142 : vector<8x512xf32>
    %144 = math.exp %143 : vector<8x512xf32>
    %cst_76 = arith.constant 1.000000e+00 : f32
    %145 = vector.broadcast %cst_76 : f32 to vector<8x512xf32>
    %146 = arith.addf %145, %144 : vector<8x512xf32>
    %147 = arith.divf %145, %146 : vector<8x512xf32>
    %148 = vector.extract_strided_slice %141 {offsets = [0, 512], sizes = [8, 128], strides = [1, 1]} : vector<8x640xf32> to vector<8x128xf32>
    %149 = math.tanh %148 : vector<8x128xf32>
    %150 = vector.extract_strided_slice %147 {offsets = [0, 0], sizes = [8, 128], strides = [1, 1]} : vector<8x512xf32> to vector<8x128xf32>
    %151 = arith.mulf %150, %149 : vector<8x128xf32>
    %152 = vector.extract_strided_slice %147 {offsets = [0, 256], sizes = [8, 128], strides = [1, 1]} : vector<8x512xf32> to vector<8x128xf32>
    %c0_77 = arith.constant 0 : index
    %c0_78 = arith.constant 0 : index
    %153 = vector.load %arg17[%c0_77, %c0_78] : memref<8x128xf32, #tpu.memory_space<vmem>>, vector<8x128xf32>
    %154 = arith.mulf %152, %153 : vector<8x128xf32>
    %155 = arith.addf %151, %154 : vector<8x128xf32>
    %156 = vector.extract_strided_slice %147 {offsets = [0, 384], sizes = [8, 128], strides = [1, 1]} : vector<8x512xf32> to vector<8x128xf32>
    %c0_79 = arith.constant 0 : index
    %c0_80 = arith.constant 0 : index
    %157 = vector.load %arg18[%c0_79, %c0_80] : memref<8x128xf32, #tpu.memory_space<vmem>>, vector<8x128xf32>
    %158 = arith.mulf %156, %157 : vector<8x128xf32>
    %159 = arith.addf %155, %158 : vector<8x128xf32>
    %160 = vector.extract_strided_slice %147 {offsets = [0, 128], sizes = [8, 128], strides = [1, 1]} : vector<8x512xf32> to vector<8x128xf32>
    %161 = math.tanh %159 : vector<8x128xf32>
    %162 = arith.mulf %160, %161 : vector<8x128xf32>
    %163 = vector.extract_strided_slice %159 {offsets = [0, 0], sizes = [1, 128], strides = [1, 1]} : vector<8x128xf32> to vector<1x128xf32>
    %c6 = arith.constant 6 : index
    %c0_81 = arith.constant 0 : index
    %164 = vector.load %arg13[%c6, %c0_81] : memref<8x128xf32, #tpu.memory_space<vmem>>, vector<1x128xf32>
    tpu.vector_store %arg13[%c6, %c0_81], %163 {strides = array<i32>} : memref<8x128xf32, #tpu.memory_space<vmem>>, vector<1x128xf32>,
    %165 = vector.extract_strided_slice %162 {offsets = [0, 0], sizes = [1, 128], strides = [1, 1]} : vector<8x128xf32> to vector<1x128xf32>
    %c6_82 = arith.constant 6 : index
    %c0_83 = arith.constant 0 : index
    %166 = vector.load %arg14[%c6_82, %c0_83] : memref<8x128xf32, #tpu.memory_space<vmem>>, vector<1x128xf32>
    tpu.vector_store %arg14[%c6_82, %c0_83], %165 {strides = array<i32>} : memref<8x128xf32, #tpu.memory_space<vmem>>, vector<1x128xf32>,
    %c0_84 = arith.constant 0 : index
    %c0_85 = arith.constant 0 : index
    %167 = vector.load %arg14[%c0_84, %c0_85] : memref<8x128xf32, #tpu.memory_space<vmem>>, vector<8x128xf32>
    %168 = arith.truncf %167 : vector<8x128xf32> to vector<8x128xbf16>
    %c0_86 = arith.constant 0 : index
    %c0_87 = arith.constant 0 : index
    %169 = vector.load %arg9[%c0_86, %c0_87] : memref<128x128xbf16, #tpu.memory_space<vmem>>, vector<128x128xbf16>
    %cst_88 = arith.constant dense<0.000000e+00> : vector<8x128xf32>
    %170 = tpu.matmul %168, %169, %cst_88 {dimension_numbers = #tpu.dot_dimension_numbers<[1], [0], [0], [1], [0, 0, 1, 1], [], []>} : vector<8x128xbf16>, vector<128x128xbf16>, vector<8x128xf32> -> vector<8x128xf32>
    %c0_89 = arith.constant 0 : index
    %c0_90 = arith.constant 0 : index
    %171 = vector.load %arg10[%c0_89, %c0_90] : memref<1x128xf32, #tpu.memory_space<vmem>>, vector<1x128xf32>
    %172 = vector.broadcast %171 : vector<1x128xf32> to vector<8x128xf32>
    %173 = arith.addf %170, %172 : vector<8x128xf32>
    %cst_91 = arith.constant dense<0xFF800000> : vector<8xf32>
    %174 = vector.multi_reduction <maximumf>, %173, %cst_91 [1] : vector<8x128xf32> to vector<8xf32>
    %175 = vector.shape_cast %174 : vector<8xf32> to vector<8x1xf32>
    %176 = vector.broadcast %175 : vector<8x1xf32> to vector<8x128xf32>
    %177 = arith.subf %173, %176 : vector<8x128xf32>
    %178 = math.exp %177 : vector<8x128xf32>
    %cst_92 = arith.constant dense<0.000000e+00> : vector<8xf32>
    %179 = vector.multi_reduction <add>, %178, %cst_92 [1] : vector<8x128xf32> to vector<8xf32>
    %180 = vector.shape_cast %179 : vector<8xf32> to vector<8x1xf32>
    %181 = math.log %180 : vector<8x1xf32>
    %182 = arith.addf %175, %181 : vector<8x1xf32>
    %183 = vector.broadcast %182 : vector<8x1xf32> to vector<8x128xf32>
    %184 = arith.subf %173, %183 : vector<8x128xf32>
    %c0_93 = arith.constant 0 : index
    %c0_94 = arith.constant 0 : index
    %185 = vector.load %arg11[%c0_93, %c0_94] : memref<8x128xf32, #tpu.memory_space<vmem>>, vector<8x128xf32>
    tpu.vector_store %arg11[%c0_93, %c0_94], %184 {strides = array<i32>} : memref<8x128xf32, #tpu.memory_space<vmem>>, vector<8x128xf32>,
    %186 = tpu.iota {dimensions = array<i32: 1>} : vector<8x128xi32>
    %c0_95 = arith.constant 0 : index
    %c0_96 = arith.constant 0 : index
    %187 = vector.load %arg2[%c0_95, %c0_96] : memref<8x1xi32, #tpu.memory_space<vmem>>, vector<8x1xi32>
    %188 = vector.broadcast %187 : vector<8x1xi32> to vector<8x128xi32>
    %189 = arith.cmpi eq, %186, %188 : vector<8x128xi32>
    %cst_97 = arith.constant 0.000000e+00 : f32
    %190 = vector.broadcast %cst_97 : f32 to vector<8x128xf32>
    %191 = arith.select %189, %184, %190 : vector<8x128xi1>, vector<8x128xf32>
    %192 = vector.shape_cast %191 : vector<8x128xf32> to vector<1x8x128xf32>
    %cst_98 = arith.constant dense<0.000000e+00> : vector<1xf32>
    %193 = vector.multi_reduction <add>, %192, %cst_98 [1, 2] : vector<1x8x128xf32> to vector<1xf32>
    %194 = vector.shape_cast %193 : vector<1xf32> to vector<1x1x1xf32>
    %195 = vector.extract %194[0, 0, 0] : f32 from vector<1x1x1xf32>
    %196 = vector.broadcast %195 : f32 to vector<1x1xf32>
    %cst_99 = arith.constant 0.000000e+00 : f32
    %197 = vector.broadcast %cst_99 : f32 to vector<1x1xf32>
    %198 = arith.subf %197, %196 : vector<1x1xf32>
    %c0_100 = arith.constant 0 : index
    %c0_101 = arith.constant 0 : index
    %199 = vector.load %arg12[%c0_100, %c0_101] : memref<1x1xf32, #tpu.memory_space<vmem>>, vector<1x1xf32>
    tpu.vector_store %arg12[%c0_100, %c0_101], %198 {strides = array<i32>} : memref<1x1xf32, #tpu.memory_space<vmem>>, vector<1x1xf32>,
    return
  }
}

</mosaic_0001>

<llo_original>
// kernel: _forward_impl.1
$region0: #{_forward_impl.1}
  #allocation0 [shape = 'u32[]', space=smem, size = 0x4, offset = 0x4, fixed_abs, tag = 'smem constant byte address 0x4 - core index']
  #allocation1 [shape = 'u32[144,128]{1,0:T(1,128)}', space=vmem, size = 0x12000, scoped, tag = 'internal scratch']
  #allocation2 [shape = 'f32[8,128]{1,0:T(8,128)}', space=vmem, size = 0x1000, scoped, tag = 'scratch operand']
  #allocation3 [shape = 'f32[8,128]{1,0:T(8,128)}', space=vmem, size = 0x1000, scoped, tag = 'scratch operand']
  #allocation4 [shape = 'f32[8,128]{1,0:T(8,128)}', space=vmem, size = 0x1000, scoped, tag = 'scratch operand']
  #allocation5 [shape = 'f32[8,128]{1,0:T(8,128)}', space=vmem, size = 0x1000, scoped, tag = 'scratch operand']
  #allocation6 [shape = 'f32[8,128]{1,0:T(8,128)}', space=vmem, size = 0x1000, scoped, tag = 'scratch operand']
  #allocation7 [shape = 'f32[8,128]{1,0:T(8,128)}', space=vmem, size = 0x1000, scoped, tag = 'scratch operand']
  %s0 = inlined_call_operand.vmem [shape: s32[8], index: 0, kind: input, shape index: {}]
  %s1 = inlined_call_operand.vmem [shape: s32[8], index: 1, kind: input, shape index: {}]
  %s2 = inlined_call_operand.vmem [shape: s32[8,1], index: 2, kind: input, shape index: {}]
  %s3 = inlined_call_operand.vmem [shape: bf16[8,16], index: 3, kind: input, shape index: {}]
  %s4 = inlined_call_operand.vmem [shape: bf16[16,384], index: 4, kind: input, shape index: {}]
  %s5 = inlined_call_operand.vmem [shape: f32[1,384], index: 5, kind: input, shape index: {}]
  %s6 = inlined_call_operand.hbm [shape: bf16[128,640], index: 6, kind: input, shape index: {}]
  %s7 = inlined_call_operand.hbm [shape: bf16[128,640], index: 7, kind: input, shape index: {}]
  %s8 = inlined_call_operand.vmem [shape: f32[1,640], index: 8, kind: input, shape index: {}]
  %s9 = inlined_call_operand.vmem [shape: bf16[128,128], index: 9, kind: input, shape index: {}]
  %s10 = inlined_call_operand.hbm [shape: f32[1,128], index: 10, kind: input, shape index: {}]
  %s11 = inlined_call_operand.hbm [shape: f32[8,128], index: 11, kind: output, shape index: {0}]
  %s12 = inlined_call_operand.hbm [shape: f32[1,1], index: 12, kind: output, shape index: {1}]
  %13 = xla_tuple %s11, %s12
  %s14 = sld [smem:[#allocation0]]
  $region82: #{_forward_impl.1} parent=0
    _
  %s16 = ssub.s32 1, %s14
  %s17 = scalar_select 0, %s16, %s14
  $region1: #{_forward_impl.1} parent=0
    #allocation8 [shape = 'u8[512]{0}', space=smem, size = 0x200, scoped, tag = 'input window, operand 0, single buffered']
    #allocation9 [shape = 's32[1]{0}', space=sflag, size = 0x4, scoped, tag = 'scoped memory for _forward_impl.1']
    #allocation10 [shape = 's32[1]{0}', space=sflag, size = 0x4, scoped, tag = 'scoped memory for _forward_impl.1']
    #allocation11 [shape = 's32[1]{0}', space=sflag, size = 0x4, scoped, tag = 'scoped memory for _forward_impl.1']
    #allocation12 [shape = 'u8[512]{0}', space=smem, size = 0x200, scoped, tag = 'input window, operand 1, single buffered']
    #allocation13 [shape = 's32[1]{0}', space=sflag, size = 0x4, scoped, tag = 'scoped memory for _forward_impl.1']
    #allocation14 [shape = 'u8[163840]{0}', space=vmem, size = 0x28000, scoped, tag = 'input window, operand 6, single buffered']
    #allocation15 [shape = 'u8[163840]{0}', space=vmem, size = 0x28000, scoped, tag = 'input window, operand 7, single buffered']
    #allocation16 [shape = 's32[1]{0}', space=sflag, size = 0x4, scoped, tag = 'scoped memory for _forward_impl.1']
    #allocation17 [shape = 'u8[512]{0}', space=vmem, size = 0x400, scoped, tag = 'input window, operand 10, single buffered']
    #allocation18 [shape = 'u8[4096]{0}', space=vmem, size = 0x1000, scoped, tag = 'output window, operand 0, single buffered']
    #allocation19 [shape = 'u8[512]{0}', space=vmem, size = 0x400, scoped, tag = 'output window, operand 1, single buffered']
    #allocation20 [shape = 's32[1]{0}', space=sflag, size = 0x4, scoped, tag = 'scoped memory for _forward_impl.1']
    %18 = vsyncpa [#allocation11], 0
    %19 = vsyncpa [#allocation13], 0
    %20 = vsyncpa [#allocation9], 0
    %21 = vsyncpa [#allocation16], 0
    %22 = vsyncpa [#allocation10], 0
    %23 = vsyncpa [#allocation20], 0
    // Predicated region
    $region2: #{_forward_impl.1} parent=1 // pred_check
      _
    $region3: #{_forward_impl.1} parent=1 // pred_check_branch
      %25 = sbr.rel (0) target = $region5
    $region4: #{_forward_impl.1} parent=1 // pred_region
      %s27 = ssub.s32 16, 16
      %28 = vsyncadd [#allocation11], %s27
      %s30 = sshll.u32 %s0, 4
      %s31 = int_to_ptr.vmem [resolvable:$true] %s30
      %33 = dma.vmem_to_smem %s31, 16, [#allocation8], [#allocation11]
    $region5: #{_forward_impl.1} parent=1 // pred_fallthru
      _
    // Predicated region
    $region6: #{_forward_impl.1} parent=1 // pred_check
      _
    $region7: #{_forward_impl.1} parent=1 // pred_check_branch
      %35 = sbr.rel (0) target = $region9
    $region8: #{_forward_impl.1} parent=1 // pred_region
      %s37 = ssub.s32 16, 16
      %38 = vsyncadd [#allocation13], %s37
      %s40 = sshll.u32 %s1, 4
      %s41 = int_to_ptr.vmem [resolvable:$true] %s40
      %43 = dma.vmem_to_smem %s41, 16, [#allocation12], [#allocation13]
    $region9: #{_forward_impl.1} parent=1 // pred_fallthru
      _
    // Predicated region
    $region10: #{_forward_impl.1} parent=1 // pred_check
      _
    $region11: #{_forward_impl.1} parent=1 // pred_check_branch
      %45 = sbr.rel (0) target = $region13
    $region12: #{_forward_impl.1} parent=1 // pred_region
      _
    $region13: #{_forward_impl.1} parent=1 // pred_fallthru
      _
    // Predicated region
    $region14: #{_forward_impl.1} parent=1 // pred_check
      _
    $region15: #{_forward_impl.1} parent=1 // pred_check_branch
      %47 = sbr.rel (0) target = $region17
    $region16: #{_forward_impl.1} parent=1 // pred_region
      _
    $region17: #{_forward_impl.1} parent=1 // pred_fallthru
      _
    // Predicated region
    $region18: #{_forward_impl.1} parent=1 // pred_check
      _
    $region19: #{_forward_impl.1} parent=1 // pred_check_branch
      %49 = sbr.rel (0) target = $region21
    $region20: #{_forward_impl.1} parent=1 // pred_region
      _
    $region21: #{_forward_impl.1} parent=1 // pred_fallthru
      _
    // Predicated region
    $region22: #{_forward_impl.1} parent=1 // pred_check
      _
    $region23: #{_forward_impl.1} parent=1 // pred_check_branch
      %51 = sbr.rel (0) target = $region25
    $region24: #{_forward_impl.1} parent=1 // pred_region
      _
    $region25: #{_forward_impl.1} parent=1 // pred_fallthru
      _
    // Predicated region
    $region26: #{_forward_impl.1} parent=1 // pred_check
      _
    $region27: #{_forward_impl.1} parent=1 // pred_check_branch
      %53 = sbr.rel (0) target = $region29
    $region28: #{_forward_impl.1} parent=1 // pred_region
      %s55 = ssub.s32 5120, 5120
      %56 = vsyncadd [#allocation9], %s55
      %s57 = sshll.u32 [#allocation14], 4
      %s58 = int_to_ptr.vmem [resolvable:$true] %s57
      %63 = dma.hbm_to_vmem [thread:$0]  %s6, 5120, %s58, [#allocation9], 320, 320, 20
    $region29: #{_forward_impl.1} parent=1 // pred_fallthru
      _
    // Predicated region
    $region30: #{_forward_impl.1} parent=1 // pred_check
      _
    $region31: #{_forward_impl.1} parent=1 // pred_check_branch
      %65 = sbr.rel (0) target = $region33
    $region32: #{_forward_impl.1} parent=1 // pred_region
      %s67 = ssub.s32 5120, 5120
      %68 = vsyncadd [#allocation16], %s67
      %s69 = sshll.u32 [#allocation15], 4
      %s70 = int_to_ptr.vmem [resolvable:$true] %s69
      %75 = dma.hbm_to_vmem [thread:$0]  %s7, 5120, %s70, [#allocation16], 320, 320, 20
    $region33: #{_forward_impl.1} parent=1 // pred_fallthru
      _
    // Predicated region
    $region34: #{_forward_impl.1} parent=1 // pred_check
      _
    $region35: #{_forward_impl.1} parent=1 // pred_check_branch
      %77 = sbr.rel (0) target = $region37
    $region36: #{_forward_impl.1} parent=1 // pred_region
      _
    $region37: #{_forward_impl.1} parent=1 // pred_fallthru
      _
    // Predicated region
    $region38: #{_forward_impl.1} parent=1 // pred_check
      _
    $region39: #{_forward_impl.1} parent=1 // pred_check_branch
      %79 = sbr.rel (0) target = $region41
    $region40: #{_forward_impl.1} parent=1 // pred_region
      _
    $region41: #{_forward_impl.1} parent=1 // pred_fallthru
      _
    // Predicated region
    $region42: #{_forward_impl.1} parent=1 // pred_check
      _
    $region43: #{_forward_impl.1} parent=1 // pred_check_branch
      %81 = sbr.rel (0) target = $region45
    $region44: #{_forward_impl.1} parent=1 // pred_region
      %s83 = ssub.s32 16, 16
      %84 = vsyncadd [#allocation16], %s83
      %s86 = sshll.u32 [#allocation17], 4
      %s87 = int_to_ptr.vmem [resolvable:$true] %s86
      %89 = dma.hbm_to_vmem [thread:$0]  %s10, 16, %s87, [#allocation16]
    $region45: #{_forward_impl.1} parent=1 // pred_fallthru
      _
    // Predicated region
    $region46: #{_forward_impl.1} parent=1 // pred_check
      _
    $region47: #{_forward_impl.1} parent=1 // pred_check_branch
      %91 = sbr.rel (0) target = $region49
    $region48: #{_forward_impl.1} parent=1 // pred_region
      %92 = dma.done [#allocation11], 16
    $region49: #{_forward_impl.1} parent=1 // pred_fallthru
      _
    // Predicated region
    $region50: #{_forward_impl.1} parent=1 // pred_check
      _
    $region51: #{_forward_impl.1} parent=1 // pred_check_branch
      %94 = sbr.rel (0) target = $region53
    $region52: #{_forward_impl.1} parent=1 // pred_region
      %95 = dma.done [#allocation13], 16
    $region53: #{_forward_impl.1} parent=1 // pred_fallthru
      _
    // Predicated region
    $region54: #{_forward_impl.1} parent=1 // pred_check
      _
    $region55: #{_forward_impl.1} parent=1 // pred_check_branch
      %97 = sbr.rel (0) target = $region57
    $region56: #{_forward_impl.1} parent=1 // pred_region
      %98 = dma.done [#allocation9], 5120
    $region57: #{_forward_impl.1} parent=1 // pred_fallthru
      _
    // Predicated region
    $region58: #{_forward_impl.1} parent=1 // pred_check
      _
    $region59: #{_forward_impl.1} parent=1 // pred_check_branch
      %100 = sbr.rel (0) target = $region61
    $region60: #{_forward_impl.1} parent=1 // pred_region
      %101 = dma.done [#allocation16], 5120
    $region61: #{_forward_impl.1} parent=1 // pred_fallthru
      _
    // Predicated region
    $region62: #{_forward_impl.1} parent=1 // pred_check
      _
    $region63: #{_forward_impl.1} parent=1 // pred_check_branch
      %103 = sbr.rel (0) target = $region65
    $region64: #{_forward_impl.1} parent=1 // pred_region
      %104 = dma.done [#allocation16], 16
    $region65: #{_forward_impl.1} parent=1 // pred_fallthru
      _
    %105 = sfence
    %107 = vst [vmem:[#allocation4] sm:$0xff] 0.0
    %108 = vst [vmem:[#allocation5] sm:$0xff] 0.0
    %109 = vst [vmem:[#allocation6] sm:$0xff] 0.0
    %110 = vst [vmem:[#allocation7] sm:$0xff] 0.0
    %v111 = vld [vmem:[%s3] sm:$0xf]
    %v112 = vld [vmem:[%s4] sm:$0xff]
    %v113 = vld [vmem:[%s4 + $0x8] sm:$0xf]
    %v114 = vld [vmem:[%s4 + $0xc] sm:$0xff]
    %v115 = vld [vmem:[%s4 + $0x14] sm:$0xf]
    %v116 = vld [vmem:[%s5] sm:$0x7]
    %v118 = vlaneseq
    %v119 = vshrl.u32 %v118, 7
    %v120 = vsub.s32 0, %v119
    %v121 = vrot.slane %v116, %v120
    %v122 = vlaneseq
    %v123 = vshrl.u32 %v122, 7
    %v124 = vsub.s32 1, %v123
    %v125 = vrot.slane %v116, %v124
    %v126 = vlaneseq
    %v127 = vshrl.u32 %v126, 7
    %v128 = vsub.s32 2, %v127
    %v129 = vrot.slane %v116, %v128
    %v137 = vunpack.c.l.b16 %v112
    %v138 = vunpack.c.h.b16 %v112
    %v139 = vunpack.c.l.b16 %v113
    %v140 = vunpack.c.l.b16 %v114
    %v141 = vunpack.c.h.b16 %v114
    %v142 = vunpack.c.l.b16 %v115
    %v143 = vpack.c.b16 %v140, %v137
    %v144 = vpack.c.b16 %v141, %v138
    %v145 = vpack.c.b16 %v142, %v139
    %vm149 = vcmask 130048
    %v151 = vsel %vm149, %v111, 0
    %153 = vmatprep.subr.bf16.mxu0 %v144
    %154 = vmatpush1.bf16.msra.mxu0 %v143
    %155 = vmatprep.subr.bf16.mxu0 0
    %156 = vmatpush1.bf16.msra.mxu0 0
    %157 = vmatprep.subr.bf16.mxu0 0
    %158 = vmatpush1.bf16.msra.mxu0 0
    %159 = vmatprep.subr.bf16.mxu0 0
    %160 = vmatpush1.bf16.msra.mxu0 0
    %161 = vmatprep.subr.bf16.mxu0 0
    %162 = vmatpush1.bf16.msra.mxu0 0
    %163 = vmatprep.subr.bf16.mxu0 0
    %164 = vmatpush1.bf16.msra.mxu0 0
    %165 = vmatprep.subr.bf16.mxu0 0
    %166 = vmatpush1.bf16.msra.mxu0 0
    %167 = vmatprep.subr.bf16.mxu0 0
    %168 = vmatpush1.bf16.msra.mxu0 0
    %169 = vmatprep.subr.bf16.mxu0 0
    %170 = vmatpush1.bf16.msra.mxu0 0
    %171 = vmatprep.subr.bf16.mxu0 0
    %172 = vmatpush1.bf16.msra.mxu0 0
    %173 = vmatprep.subr.bf16.mxu0 0
    %174 = vmatpush1.bf16.msra.mxu0 0
    %175 = vmatprep.subr.bf16.mxu0 0
    %176 = vmatpush1.bf16.msra.mxu0 0
    %177 = vmatprep.subr.bf16.mxu0 0
    %178 = vmatpush1.bf16.msra.mxu0 0
    %179 = vmatprep.subr.bf16.mxu0 0
    %180 = vmatpush1.bf16.msra.mxu0 0
    %181 = vmatprep.subr.bf16.mxu0 0
    %182 = vmatpush1.bf16.msra.mxu0 0
    %183 = vmatprep.subr.bf16.mxu0 0
    %184 = vmatpush1.bf16.msra.mxu0 0
    %185 = vmatprep.mubr.bf16.mxu0 0
    %186 = vmatmul.mubr.bf16.gmra.mrb[0].mxu0 %v151
    %v187 = vpop.f32.mrb[0].mxu0
    %v188 = vadd.f32 %v121, %v187
    %v189 = vpop.f32.mrb[0].mxu0
    %v190 = vadd.f32 %v125, %v189
    %v191 = vpop.f32.mrb[0].mxu0
    %v192 = vpop.f32.mrb[0].mxu0
    %193 = vdwg.mxu0
    %194 = vmatprep.subr.bf16.mxu0 0
    %195 = vmatpush1.bf16.msra.mxu0 %v145
    %196 = vmatprep.subr.bf16.mxu0 0
    %197 = vmatpush1.bf16.msra.mxu0 0
    %198 = vmatprep.subr.bf16.mxu0 0
    %199 = vmatpush1.bf16.msra.mxu0 0
    %200 = vmatprep.subr.bf16.mxu0 0
    %201 = vmatpush1.bf16.msra.mxu0 0
    %202 = vmatprep.subr.bf16.mxu0 0
    %203 = vmatpush1.bf16.msra.mxu0 0
    %204 = vmatprep.subr.bf16.mxu0 0
    %205 = vmatpush1.bf16.msra.mxu0 0
    %206 = vmatprep.subr.bf16.mxu0 0
    %207 = vmatpush1.bf16.msra.mxu0 0
    %208 = vmatprep.subr.bf16.mxu0 0
    %209 = vmatpush1.bf16.msra.mxu0 0
    %210 = vmatprep.subr.bf16.mxu0 0
    %211 = vmatpush1.bf16.msra.mxu0 0
    %212 = vmatprep.subr.bf16.mxu0 0
    %213 = vmatpush1.bf16.msra.mxu0 0
    %214 = vmatprep.subr.bf16.mxu0 0
    %215 = vmatpush1.bf16.msra.mxu0 0
    %216 = vmatprep.subr.bf16.mxu0 0
    %217 = vmatpush1.bf16.msra.mxu0 0
    %218 = vmatprep.subr.bf16.mxu0 0
    %219 = vmatpush1.bf16.msra.mxu0 0
    %220 = vmatprep.subr.bf16.mxu0 0
    %221 = vmatpush1.bf16.msra.mxu0 0
    %222 = vmatprep.subr.bf16.mxu0 0
    %223 = vmatpush1.bf16.msra.mxu0 0
    %224 = vmatprep.subr.bf16.mxu0 0
    %225 = vmatpush1.bf16.msra.mxu0 0
    %226 = vmatprep.mubr.bf16.mxu0 0
    %227 = vmatmul.mubr.bf16.gmra.mrb[0].mxu0 %v151
    %v228 = vpop.f32.mrb[0].mxu0
    %v229 = vadd.f32 %v129, %v228
    %v230 = vpop.f32.mrb[0].mxu0
    %v231 = vpop.f32.mrb[0].mxu0
    %v232 = vpop.f32.mrb[0].mxu0
    %233 = vdwg.mxu0
    %v234 = vxor.u32 %v188, 2147483648
    %v235 = vxor.u32 %v190, 2147483648
    %v236 = vmul.f32 %v234, 1.442695
    %v237 = vpow.pop %v236
    %v238 = vmul.f32 %v235, 1.442695
    %v239 = vpow.pop %v238
    %v240 = vadd.f32 %v237, 1.0
    %v241 = vadd.f32 %v239, 1.0
    %v242 = vrcp.pop %v240
    %v243 = vmul.f32 1.0, %v242
    %v244 = vrcp.pop %v241
    %v245 = vmul.f32 1.0, %v244
    %v246 = vtanh.pop %v229
    %v247 = vmul.f32 %v243, %v246
    %v248 = vxor.u32 %v247, 2147483648
    %v249 = vmul.f32 %v248, 1.442695
    %v250 = vpow.pop %v249
    %v251 = vadd.f32 %v250, 1.0
    %v252 = vrcp.pop %v251
    %v253 = vmul.f32 1.0, %v252
    %v254 = vmul.f32 %v245, %v253
    %255 = vst [vmem:[#allocation2] sm:$0xff] %v247
    %256 = vst [vmem:[#allocation3] sm:$0xff] %v254
    %v257 = vld [vmem:[#allocation14] sm:$0xff]
    %v258 = vld [vmem:[#allocation14 + $0x8] sm:$0xff]
    %v259 = vld [vmem:[#allocation14 + $0x10] sm:$0xf]
    %v260 = vld [vmem:[#allocation14 + $0x14] sm:$0xff]
    %v261 = vld [vmem:[#allocation14 + $0x1c] sm:$0xff]
    %v262 = vld [vmem:[#allocation14 + $0x24] sm:$0xf]
    %v263 = vld [vmem:[#allocation14 + $0x28] sm:$0xff]
    %v264 = vld [vmem:[#allocation14 + $0x30] sm:$0xff]
    %v265 = vld [vmem:[#allocation14 + $0x38] sm:$0xf]
    %v266 = vld [vmem:[#allocation14 + $0x3c] sm:$0xff]
    %v267 = vld [vmem:[#allocation14 + $0x44] sm:$0xff]
    %v268 = vld [vmem:[#allocation14 + $0x4c] sm:$0xf]
    %v269 = vld [vmem:[#allocation14 + $0x50] sm:$0xff]
    %v270 = vld [vmem:[#allocation14 + $0x58] sm:$0xff]
    %v271 = vld [vmem:[#allocation14 + $0x60] sm:$0xf]
    %v272 = vld [vmem:[#allocation14 + $0x64] sm:$0xff]
    %v273 = vld [vmem:[#allocation14 + $0x6c] sm:$0xff]
    %v274 = vld [vmem:[#allocation14 + $0x74] sm:$0xf]
    %v275 = vld [vmem:[#allocation14 + $0x78] sm:$0xff]
    %v276 = vld [vmem:[#allocation14 + $0x80] sm:$0xff]
    %v277 = vld [vmem:[#allocation14 + $0x88] sm:$0xf]
    %v278 = vld [vmem:[#allocation14 + $0x8c] sm:$0xff]
    %v279 = vld [vmem:[#allocation14 + $0x94] sm:$0xff]
    %v280 = vld [vmem:[#allocation14 + $0x9c] sm:$0xf]
    %v281 = vld [vmem:[#allocation14 + $0xa0] sm:$0xff]
    %v282 = vld [vmem:[#allocation14 + $0xa8] sm:$0xff]
    %v283 = vld [vmem:[#allocation14 + $0xb0] sm:$0xf]
    %v284 = vld [vmem:[#allocation14 + $0xb4] sm:$0xff]
    %v285 = vld [vmem:[#allocation14 + $0xbc] sm:$0xff]
    %v286 = vld [vmem:[#allocation14 + $0xc4] sm:$0xf]
    %v287 = vld [vmem:[#allocation14 + $0xc8] sm:$0xff]
    %v288 = vld [vmem:[#allocation14 + $0xd0] sm:$0xff]
    %v289 = vld [vmem:[#allocation14 + $0xd8] sm:$0xf]
    %v290 = vld [vmem:[#allocation14 + $0xdc] sm:$0xff]
    %v291 = vld [vmem:[#allocation14 + $0xe4] sm:$0xff]
    %v292 = vld [vmem:[#allocation14 + $0xec] sm:$0xf]
    %v293 = vld [vmem:[#allocation14 + $0xf0] sm:$0xff]
    %v294 = vld [vmem:[#allocation14 + $0xf8] sm:$0xff]
    %v295 = vld [vmem:[#allocation14 + $0x100] sm:$0xf]
    %v296 = vld [vmem:[#allocation14 + $0x104] sm:$0xff]
    %v297 = vld [vmem:[#allocation14 + $0x10c] sm:$0xff]
    %v298 = vld [vmem:[#allocation14 + $0x114] sm:$0xf]
    %v299 = vld [vmem:[#allocation14 + $0x118] sm:$0xff]
    %v300 = vld [vmem:[#allocation14 + $0x120] sm:$0xff]
    %v301 = vld [vmem:[#allocation14 + $0x128] sm:$0xf]
    %v302 = vld [vmem:[#allocation14 + $0x12c] sm:$0xff]
    %v303 = vld [vmem:[#allocation14 + $0x134] sm:$0xff]
    %v304 = vld [vmem:[#allocation14 + $0x13c] sm:$0xf]
    %v305 = vld [vmem:[#allocation15] sm:$0xff]
    %v306 = vld [vmem:[#allocation15 + $0x8] sm:$0xff]
    %v307 = vld [vmem:[#allocation15 + $0x10] sm:$0xf]
    %v308 = vld [vmem:[#allocation15 + $0x14] sm:$0xff]
    %v309 = vld [vmem:[#allocation15 + $0x1c] sm:$0xff]
    %v310 = vld [vmem:[#allocation15 + $0x24] sm:$0xf]
    %v311 = vld [vmem:[#allocation15 + $0x28] sm:$0xff]
    %v312 = vld [vmem:[#allocation15 + $0x30] sm:$0xff]
    %v313 = vld [vmem:[#allocation15 + $0x38] sm:$0xf]
    %v314 = vld [vmem:[#allocation15 + $0x3c] sm:$0xff]
    %v315 = vld [vmem:[#allocation15 + $0x44] sm:$0xff]
    %v316 = vld [vmem:[#allocation15 + $0x4c] sm:$0xf]
    %v317 = vld [vmem:[#allocation15 + $0x50] sm:$0xff]
    %v318 = vld [vmem:[#allocation15 + $0x58] sm:$0xff]
    %v319 = vld [vmem:[#allocation15 + $0x60] sm:$0xf]
    %v320 = vld [vmem:[#allocation15 + $0x64] sm:$0xff]
    %v321 = vld [vmem:[#allocation15 + $0x6c] sm:$0xff]
    %v322 = vld [vmem:[#allocation15 + $0x74] sm:$0xf]
    %v323 = vld [vmem:[#allocation15 + $0x78] sm:$0xff]
    %v324 = vld [vmem:[#allocation15 + $0x80] sm:$0xff]
    %v325 = vld [vmem:[#allocation15 + $0x88] sm:$0xf]
    %v326 = vld [vmem:[#allocation15 + $0x8c] sm:$0xff]
    %v327 = vld [vmem:[#allocation15 + $0x94] sm:$0xff]
    %v328 = vld [vmem:[#allocation15 + $0x9c] sm:$0xf]
    %v329 = vld [vmem:[#allocation15 + $0xa0] sm:$0xff]
    %v330 = vld [vmem:[#allocation15 + $0xa8] sm:$0xff]
    %v331 = vld [vmem:[#allocation15 + $0xb0] sm:$0xf]
    %v332 = vld [vmem:[#allocation15 + $0xb4] sm:$0xff]
    %v333 = vld [vmem:[#allocation15 + $0xbc] sm:$0xff]
    %v334 = vld [vmem:[#allocation15 + $0xc4] sm:$0xf]
    %v335 = vld [vmem:[#allocation15 + $0xc8] sm:$0xff]
    %v336 = vld [vmem:[#allocation15 + $0xd0] sm:$0xff]
    %v337 = vld [vmem:[#allocation15 + $0xd8] sm:$0xf]
    %v338 = vld [vmem:[#allocation15 + $0xdc] sm:$0xff]
    %v339 = vld [vmem:[#allocation15 + $0xe4] sm:$0xff]
    %v340 = vld [vmem:[#allocation15 + $0xec] sm:$0xf]
    %v341 = vld [vmem:[#allocation15 + $0xf0] sm:$0xff]
    %v342 = vld [vmem:[#allocation15 + $0xf8] sm:$0xff]
    %v343 = vld [vmem:[#allocation15 + $0x100] sm:$0xf]
    %v344 = vld [vmem:[#allocation15 + $0x104] sm:$0xff]
    %v345 = vld [vmem:[#allocation15 + $0x10c] sm:$0xff]
    %v346 = vld [vmem:[#allocation15 + $0x114] sm:$0xf]
    %v347 = vld [vmem:[#allocation15 + $0x118] sm:$0xff]
    %v348 = vld [vmem:[#allocation15 + $0x120] sm:$0xff]
    %v349 = vld [vmem:[#allocation15 + $0x128] sm:$0xf]
    %v350 = vld [vmem:[#allocation15 + $0x12c] sm:$0xff]
    %v351 = vld [vmem:[#allocation15 + $0x134] sm:$0xff]
    %v352 = vld [vmem:[#allocation15 + $0x13c] sm:$0xf]
    %v353 = vld [vmem:[%s8] sm:$0x1f]
    %s354 = sld [smem:[#allocation8 + $0x4]]
    %s355 = sld [smem:[#allocation12 + $0x4]]
    %s356 = scalar_lea.vmem [#allocation3], %s354
    %v357 = vld [vmem:[%s356] sm:$0x1]
    %358 = vst [vmem:[#allocation4] sm:$0x1] %v357
    %s359 = scalar_lea.vmem [#allocation3], %s355
    %v360 = vld [vmem:[%s359] sm:$0x1]
    %361 = vst [vmem:[#allocation5] sm:$0x1] %v360
    %s362 = scalar_lea.vmem [#allocation2], %s354
    %v363 = vld [vmem:[%s362] sm:$0x1]
    %364 = vst [vmem:[#allocation6] sm:$0x1] %v363
    %s365 = scalar_lea.vmem [#allocation2], %s355
    %v366 = vld [vmem:[%s365] sm:$0x1]
    %367 = vst [vmem:[#allocation7] sm:$0x1] %v366
    %s368 = sld [smem:[#allocation8 + $0x5]]
    %s369 = sld [smem:[#allocation12 + $0x5]]
    %s370 = scalar_lea.vmem [#allocation3], %s368
    %v371 = vld [vmem:[%s370] sm:$0x1]
    %372 = vst [vmem:[#allocation4 + $0x1] sm:$0x1] %v371
    %s373 = scalar_lea.vmem [#allocation3], %s369
    %v374 = vld [vmem:[%s373] sm:$0x1]
    %375 = vst [vmem:[#allocation5 + $0x1] sm:$0x1] %v374
    %s376 = scalar_lea.vmem [#allocation2], %s368
    %v377 = vld [vmem:[%s376] sm:$0x1]
    %378 = vst [vmem:[#allocation6 + $0x1] sm:$0x1] %v377
    %s379 = scalar_lea.vmem [#allocation2], %s369
    %v380 = vld [vmem:[%s379] sm:$0x1]
    %381 = vst [vmem:[#allocation7 + $0x1] sm:$0x1] %v380
    %v382 = vld [vmem:[#allocation4] sm:$0xff]
    %v383 = vpack.c.bf16 %v382, %v382
    %v384 = vld [vmem:[#allocation5] sm:$0xff]
    %v385 = vpack.c.bf16 %v384, %v384
    %v434 = vunpack.c.l.b16 %v305
    %v435 = vunpack.c.h.b16 %v305
    %v436 = vunpack.c.l.b16 %v306
    %v437 = vunpack.c.h.b16 %v306
    %v438 = vunpack.c.l.b16 %v307
    %v439 = vunpack.c.l.b16 %v308
    %v440 = vunpack.c.h.b16 %v308
    %v441 = vunpack.c.l.b16 %v309
    %v442 = vunpack.c.h.b16 %v309
    %v443 = vunpack.c.l.b16 %v310
    %v444 = vunpack.c.l.b16 %v311
    %v445 = vunpack.c.h.b16 %v311
    %v446 = vunpack.c.l.b16 %v312
    %v447 = vunpack.c.h.b16 %v312
    %v448 = vunpack.c.l.b16 %v313
    %v449 = vunpack.c.l.b16 %v314
    %v450 = vunpack.c.h.b16 %v314
    %v451 = vunpack.c.l.b16 %v315
    %v452 = vunpack.c.h.b16 %v315
    %v453 = vunpack.c.l.b16 %v316
    %v454 = vunpack.c.l.b16 %v317
    %v455 = vunpack.c.h.b16 %v317
    %v456 = vunpack.c.l.b16 %v318
    %v457 = vunpack.c.h.b16 %v318
    %v458 = vunpack.c.l.b16 %v319
    %v459 = vunpack.c.l.b16 %v320
    %v460 = vunpack.c.h.b16 %v320
    %v461 = vunpack.c.l.b16 %v321
    %v462 = vunpack.c.h.b16 %v321
    %v463 = vunpack.c.l.b16 %v322
    %v464 = vunpack.c.l.b16 %v323
    %v465 = vunpack.c.h.b16 %v323
    %v466 = vunpack.c.l.b16 %v324
    %v467 = vunpack.c.h.b16 %v324
    %v468 = vunpack.c.l.b16 %v325
    %v469 = vunpack.c.l.b16 %v326
    %v470 = vunpack.c.h.b16 %v326
    %v471 = vunpack.c.l.b16 %v327
    %v472 = vunpack.c.h.b16 %v327
    %v473 = vunpack.c.l.b16 %v328
    %v474 = vunpack.c.l.b16 %v329
    %v475 = vunpack.c.h.b16 %v329
    %v476 = vunpack.c.l.b16 %v330
    %v477 = vunpack.c.h.b16 %v330
    %v478 = vunpack.c.l.b16 %v331
    %v479 = vunpack.c.l.b16 %v332
    %v480 = vunpack.c.h.b16 %v332
    %v481 = vunpack.c.l.b16 %v333
    %v482 = vunpack.c.h.b16 %v333
    %v483 = vunpack.c.l.b16 %v334
    %v484 = vunpack.c.l.b16 %v335
    %v485 = vunpack.c.h.b16 %v335
    %v486 = vunpack.c.l.b16 %v336
    %v487 = vunpack.c.h.b16 %v336
    %v488 = vunpack.c.l.b16 %v337
    %v489 = vunpack.c.l.b16 %v338
    %v490 = vunpack.c.h.b16 %v338
    %v491 = vunpack.c.l.b16 %v339
    %v492 = vunpack.c.h.b16 %v339
    %v493 = vunpack.c.l.b16 %v340
    %v494 = vunpack.c.l.b16 %v341
    %v495 = vunpack.c.h.b16 %v341
    %v496 = vunpack.c.l.b16 %v342
    %v497 = vunpack.c.h.b16 %v342
    %v498 = vunpack.c.l.b16 %v343
    %v499 = vunpack.c.l.b16 %v344
    %v500 = vunpack.c.h.b16 %v344
    %v501 = vunpack.c.l.b16 %v345
    %v502 = vunpack.c.h.b16 %v345
    %v503 = vunpack.c.l.b16 %v346
    %v504 = vunpack.c.l.b16 %v347
    %v505 = vunpack.c.h.b16 %v347
    %v506 = vunpack.c.l.b16 %v348
    %v507 = vunpack.c.h.b16 %v348
    %v508 = vunpack.c.l.b16 %v349
    %v509 = vunpack.c.l.b16 %v350
    %v510 = vunpack.c.h.b16 %v350
    %v511 = vunpack.c.l.b16 %v351
    %v512 = vunpack.c.h.b16 %v351
    %v513 = vunpack.c.l.b16 %v352
    %v514 = vpack.c.b16 %v439, %v434
    %v515 = vpack.c.b16 %v440, %v435
    %v516 = vpack.c.b16 %v441, %v436
    %v517 = vpack.c.b16 %v442, %v437
    %v518 = vpack.c.b16 %v443, %v438
    %v519 = vpack.c.b16 %v449, %v444
    %v520 = vpack.c.b16 %v450, %v445
    %v521 = vpack.c.b16 %v451, %v446
    %v522 = vpack.c.b16 %v452, %v447
    %v523 = vpack.c.b16 %v453, %v448
    %v524 = vpack.c.b16 %v459, %v454
    %v525 = vpack.c.b16 %v460, %v455
    %v526 = vpack.c.b16 %v461, %v456
    %v527 = vpack.c.b16 %v462, %v457
    %v528 = vpack.c.b16 %v463, %v458
    %v529 = vpack.c.b16 %v469, %v464
    %v530 = vpack.c.b16 %v470, %v465
    %v531 = vpack.c.b16 %v471, %v466
    %v532 = vpack.c.b16 %v472, %v467
    %v533 = vpack.c.b16 %v473, %v468
    %v534 = vpack.c.b16 %v479, %v474
    %v535 = vpack.c.b16 %v480, %v475
    %v536 = vpack.c.b16 %v481, %v476
    %v537 = vpack.c.b16 %v482, %v477
    %v538 = vpack.c.b16 %v483, %v478
    %v539 = vpack.c.b16 %v489, %v484
    %v540 = vpack.c.b16 %v490, %v485
    %v541 = vpack.c.b16 %v491, %v486
    %v542 = vpack.c.b16 %v492, %v487
    %v543 = vpack.c.b16 %v493, %v488
    %v544 = vpack.c.b16 %v499, %v494
    %v545 = vpack.c.b16 %v500, %v495
    %v546 = vpack.c.b16 %v501, %v496
    %v547 = vpack.c.b16 %v502, %v497
    %v548 = vpack.c.b16 %v503, %v498
    %v549 = vpack.c.b16 %v509, %v504
    %v550 = vpack.c.b16 %v510, %v505
    %v551 = vpack.c.b16 %v511, %v506
    %v552 = vpack.c.b16 %v512, %v507
    %v553 = vpack.c.b16 %v513, %v508
    %594 = vmatprep.subr.bf16.mxu0 %v515
    %595 = vmatpush1.bf16.msra.mxu0 %v514
    %596 = vmatprep.subr.bf16.mxu0 %v520
    %597 = vmatpush1.bf16.msra.mxu0 %v519
    %598 = vmatprep.subr.bf16.mxu0 %v525
    %599 = vmatpush1.bf16.msra.mxu0 %v524
    %600 = vmatprep.subr.bf16.mxu0 %v530
    %601 = vmatpush1.bf16.msra.mxu0 %v529
    %602 = vmatprep.subr.bf16.mxu0 %v535
    %603 = vmatpush1.bf16.msra.mxu0 %v534
    %604 = vmatprep.subr.bf16.mxu0 %v540
    %605 = vmatpush1.bf16.msra.mxu0 %v539
    %606 = vmatprep.subr.bf16.mxu0 %v545
    %607 = vmatpush1.bf16.msra.mxu0 %v544
    %608 = vmatprep.subr.bf16.mxu0 %v550
    %609 = vmatpush1.bf16.msra.mxu0 %v549
    %610 = vmatprep.subr.bf16.mxu0 0
    %611 = vmatpush1.bf16.msra.mxu0 0
    %612 = vmatprep.subr.bf16.mxu0 0
    %613 = vmatpush1.bf16.msra.mxu0 0
    %614 = vmatprep.subr.bf16.mxu0 0
    %615 = vmatpush1.bf16.msra.mxu0 0
    %616 = vmatprep.subr.bf16.mxu0 0
    %617 = vmatpush1.bf16.msra.mxu0 0
    %618 = vmatprep.subr.bf16.mxu0 0
    %619 = vmatpush1.bf16.msra.mxu0 0
    %620 = vmatprep.subr.bf16.mxu0 0
    %621 = vmatpush1.bf16.msra.mxu0 0
    %622 = vmatprep.subr.bf16.mxu0 0
    %623 = vmatpush1.bf16.msra.mxu0 0
    %624 = vmatprep.subr.bf16.mxu0 0
    %625 = vmatpush1.bf16.msra.mxu0 0
    %626 = vmatprep.mubr.bf16.mxu0 0
    %627 = vmatmul.mubr.bf16.gmra.mrb[0].mxu0 %v385
    %v628 = vpop.f32.mrb[0].mxu0
    %v629 = vadd.f32 0.0, %v628
    %v630 = vpop.f32.mrb[0].mxu0
    %v631 = vadd.f32 0.0, %v630
    %v632 = vpop.f32.mrb[0].mxu0
    %v633 = vpop.f32.mrb[0].mxu0
    %634 = vdwg.mxu0
    %635 = vmatprep.subr.bf16.mxu0 %v517
    %636 = vmatpush1.bf16.msra.mxu0 %v516
    %637 = vmatprep.subr.bf16.mxu0 %v522
    %638 = vmatpush1.bf16.msra.mxu0 %v521
    %639 = vmatprep.subr.bf16.mxu0 %v527
    %640 = vmatpush1.bf16.msra.mxu0 %v526
    %641 = vmatprep.subr.bf16.mxu0 %v532
    %642 = vmatpush1.bf16.msra.mxu0 %v531
    %643 = vmatprep.subr.bf16.mxu0 %v537
    %644 = vmatpush1.bf16.msra.mxu0 %v536
    %645 = vmatprep.subr.bf16.mxu0 %v542
    %646 = vmatpush1.bf16.msra.mxu0 %v541
    %647 = vmatprep.subr.bf16.mxu0 %v547
    %648 = vmatpush1.bf16.msra.mxu0 %v546
    %649 = vmatprep.subr.bf16.mxu0 %v552
    %650 = vmatpush1.bf16.msra.mxu0 %v551
    %651 = vmatprep.subr.bf16.mxu0 0
    %652 = vmatpush1.bf16.msra.mxu0 0
    %653 = vmatprep.subr.bf16.mxu0 0
    %654 = vmatpush1.bf16.msra.mxu0 0
    %655 = vmatprep.subr.bf16.mxu0 0
    %656 = vmatpush1.bf16.msra.mxu0 0
    %657 = vmatprep.subr.bf16.mxu0 0
    %658 = vmatpush1.bf16.msra.mxu0 0
    %659 = vmatprep.subr.bf16.mxu0 0
    %660 = vmatpush1.bf16.msra.mxu0 0
    %661 = vmatprep.subr.bf16.mxu0 0
    %662 = vmatpush1.bf16.msra.mxu0 0
    %663 = vmatprep.subr.bf16.mxu0 0
    %664 = vmatpush1.bf16.msra.mxu0 0
    %665 = vmatprep.subr.bf16.mxu0 0
    %666 = vmatpush1.bf16.msra.mxu0 0
    %667 = vmatprep.mubr.bf16.mxu0 0
    %668 = vmatmul.mubr.bf16.gmra.mrb[0].mxu0 %v385
    %v669 = vpop.f32.mrb[0].mxu0
    %v670 = vadd.f32 0.0, %v669
    %v671 = vpop.f32.mrb[0].mxu0
    %v672 = vadd.f32 0.0, %v671
    %v673 = vpop.f32.mrb[0].mxu0
    %v674 = vpop.f32.mrb[0].mxu0
    %675 = vdwg.mxu0
    %676 = vmatprep.subr.bf16.mxu0 0
    %677 = vmatpush1.bf16.msra.mxu0 %v518
    %678 = vmatprep.subr.bf16.mxu0 0
    %679 = vmatpush1.bf16.msra.mxu0 %v523
    %680 = vmatprep.subr.bf16.mxu0 0
    %681 = vmatpush1.bf16.msra.mxu0 %v528
    %682 = vmatprep.subr.bf16.mxu0 0
    %683 = vmatpush1.bf16.msra.mxu0 %v533
    %684 = vmatprep.subr.bf16.mxu0 0
    %685 = vmatpush1.bf16.msra.mxu0 %v538
    %686 = vmatprep.subr.bf16.mxu0 0
    %687 = vmatpush1.bf16.msra.mxu0 %v543
    %688 = vmatprep.subr.bf16.mxu0 0
    %689 = vmatpush1.bf16.msra.mxu0 %v548
    %690 = vmatprep.subr.bf16.mxu0 0
    %691 = vmatpush1.bf16.msra.mxu0 %v553
    %692 = vmatprep.subr.bf16.mxu0 0
    %693 = vmatpush1.bf16.msra.mxu0 0
    %694 = vmatprep.subr.bf16.mxu0 0
    %695 = vmatpush1.bf16.msra.mxu0 0
    %696 = vmatprep.subr.bf16.mxu0 0
    %697 = vmatpush1.bf16.msra.mxu0 0
    %698 = vmatprep.subr.bf16.mxu0 0
    %699 = vmatpush1.bf16.msra.mxu0 0
    %700 = vmatprep.subr.bf16.mxu0 0
    %701 = vmatpush1.bf16.msra.mxu0 0
    %702 = vmatprep.subr.bf16.mxu0 0
    %703 = vmatpush1.bf16.msra.mxu0 0
    %704 = vmatprep.subr.bf16.mxu0 0
    %705 = vmatpush1.bf16.msra.mxu0 0
    %706 = vmatprep.subr.bf16.mxu0 0
    %707 = vmatpush1.bf16.msra.mxu0 0
    %708 = vmatprep.mubr.bf16.mxu0 0
    %709 = vmatmul.mubr.bf16.gmra.mrb[0].mxu0 %v385
    %v710 = vpop.f32.mrb[0].mxu0
    %v711 = vadd.f32 0.0, %v710
    %v712 = vpop.f32.mrb[0].mxu0
    %v713 = vpop.f32.mrb[0].mxu0
    %v714 = vpop.f32.mrb[0].mxu0
    %715 = vdwg.mxu0
    %v764 = vunpack.c.l.b16 %v257
    %v765 = vunpack.c.h.b16 %v257
    %v766 = vunpack.c.l.b16 %v258
    %v767 = vunpack.c.h.b16 %v258
    %v768 = vunpack.c.l.b16 %v259
    %v769 = vunpack.c.l.b16 %v260
    %v770 = vunpack.c.h.b16 %v260
    %v771 = vunpack.c.l.b16 %v261
    %v772 = vunpack.c.h.b16 %v261
    %v773 = vunpack.c.l.b16 %v262
    %v774 = vunpack.c.l.b16 %v263
    %v775 = vunpack.c.h.b16 %v263
    %v776 = vunpack.c.l.b16 %v264
    %v777 = vunpack.c.h.b16 %v264
    %v778 = vunpack.c.l.b16 %v265
    %v779 = vunpack.c.l.b16 %v266
    %v780 = vunpack.c.h.b16 %v266
    %v781 = vunpack.c.l.b16 %v267
    %v782 = vunpack.c.h.b16 %v267
    %v783 = vunpack.c.l.b16 %v268
    %v784 = vunpack.c.l.b16 %v269
    %v785 = vunpack.c.h.b16 %v269
    %v786 = vunpack.c.l.b16 %v270
    %v787 = vunpack.c.h.b16 %v270
    %v788 = vunpack.c.l.b16 %v271
    %v789 = vunpack.c.l.b16 %v272
    %v790 = vunpack.c.h.b16 %v272
    %v791 = vunpack.c.l.b16 %v273
    %v792 = vunpack.c.h.b16 %v273
    %v793 = vunpack.c.l.b16 %v274
    %v794 = vunpack.c.l.b16 %v275
    %v795 = vunpack.c.h.b16 %v275
    %v796 = vunpack.c.l.b16 %v276
    %v797 = vunpack.c.h.b16 %v276
    %v798 = vunpack.c.l.b16 %v277
    %v799 = vunpack.c.l.b16 %v278
    %v800 = vunpack.c.h.b16 %v278
    %v801 = vunpack.c.l.b16 %v279
    %v802 = vunpack.c.h.b16 %v279
    %v803 = vunpack.c.l.b16 %v280
    %v804 = vunpack.c.l.b16 %v281
    %v805 = vunpack.c.h.b16 %v281
    %v806 = vunpack.c.l.b16 %v282
    %v807 = vunpack.c.h.b16 %v282
    %v808 = vunpack.c.l.b16 %v283
    %v809 = vunpack.c.l.b16 %v284
    %v810 = vunpack.c.h.b16 %v284
    %v811 = vunpack.c.l.b16 %v285
    %v812 = vunpack.c.h.b16 %v285
    %v813 = vunpack.c.l.b16 %v286
    %v814 = vunpack.c.l.b16 %v287
    %v815 = vunpack.c.h.b16 %v287
    %v816 = vunpack.c.l.b16 %v288
    %v817 = vunpack.c.h.b16 %v288
    %v818 = vunpack.c.l.b16 %v289
    %v819 = vunpack.c.l.b16 %v290
    %v820 = vunpack.c.h.b16 %v290
    %v821 = vunpack.c.l.b16 %v291
    %v822 = vunpack.c.h.b16 %v291
    %v823 = vunpack.c.l.b16 %v292
    %v824 = vunpack.c.l.b16 %v293
    %v825 = vunpack.c.h.b16 %v293
    %v826 = vunpack.c.l.b16 %v294
    %v827 = vunpack.c.h.b16 %v294
    %v828 = vunpack.c.l.b16 %v295
    %v829 = vunpack.c.l.b16 %v296
    %v830 = vunpack.c.h.b16 %v296
    %v831 = vunpack.c.l.b16 %v297
    %v832 = vunpack.c.h.b16 %v297
    %v833 = vunpack.c.l.b16 %v298
    %v834 = vunpack.c.l.b16 %v299
    %v835 = vunpack.c.h.b16 %v299
    %v836 = vunpack.c.l.b16 %v300
    %v837 = vunpack.c.h.b16 %v300
    %v838 = vunpack.c.l.b16 %v301
    %v839 = vunpack.c.l.b16 %v302
    %v840 = vunpack.c.h.b16 %v302
    %v841 = vunpack.c.l.b16 %v303
    %v842 = vunpack.c.h.b16 %v303
    %v843 = vunpack.c.l.b16 %v304
    %v844 = vpack.c.b16 %v769, %v764
    %v845 = vpack.c.b16 %v770, %v765
    %v846 = vpack.c.b16 %v771, %v766
    %v847 = vpack.c.b16 %v772, %v767
    %v848 = vpack.c.b16 %v773, %v768
    %v849 = vpack.c.b16 %v779, %v774
    %v850 = vpack.c.b16 %v780, %v775
    %v851 = vpack.c.b16 %v781, %v776
    %v852 = vpack.c.b16 %v782, %v777
    %v853 = vpack.c.b16 %v783, %v778
    %v854 = vpack.c.b16 %v789, %v784
    %v855 = vpack.c.b16 %v790, %v785
    %v856 = vpack.c.b16 %v791, %v786
    %v857 = vpack.c.b16 %v792, %v787
    %v858 = vpack.c.b16 %v793, %v788
    %v859 = vpack.c.b16 %v799, %v794
    %v860 = vpack.c.b16 %v800, %v795
    %v861 = vpack.c.b16 %v801, %v796
    %v862 = vpack.c.b16 %v802, %v797
    %v863 = vpack.c.b16 %v803, %v798
    %v864 = vpack.c.b16 %v809, %v804
    %v865 = vpack.c.b16 %v810, %v805
    %v866 = vpack.c.b16 %v811, %v806
    %v867 = vpack.c.b16 %v812, %v807
    %v868 = vpack.c.b16 %v813, %v808
    %v869 = vpack.c.b16 %v819, %v814
    %v870 = vpack.c.b16 %v820, %v815
    %v871 = vpack.c.b16 %v821, %v816
    %v872 = vpack.c.b16 %v822, %v817
    %v873 = vpack.c.b16 %v823, %v818
    %v874 = vpack.c.b16 %v829, %v824
    %v875 = vpack.c.b16 %v830, %v825
    %v876 = vpack.c.b16 %v831, %v826
    %v877 = vpack.c.b16 %v832, %v827
    %v878 = vpack.c.b16 %v833, %v828
    %v879 = vpack.c.b16 %v839, %v834
    %v880 = vpack.c.b16 %v840, %v835
    %v881 = vpack.c.b16 %v841, %v836
    %v882 = vpack.c.b16 %v842, %v837
    %v883 = vpack.c.b16 %v843, %v838
    %924 = vmatprep.subr.bf16.mxu0 %v845
    %925 = vmatpush1.bf16.msra.mxu0 %v844
    %926 = vmatprep.subr.bf16.mxu0 %v850
    %927 = vmatpush1.bf16.msra.mxu0 %v849
    %928 = vmatprep.subr.bf16.mxu0 %v855
    %929 = vmatpush1.bf16.msra.mxu0 %v854
    %930 = vmatprep.subr.bf16.mxu0 %v860
    %931 = vmatpush1.bf16.msra.mxu0 %v859
    %932 = vmatprep.subr.bf16.mxu0 %v865
    %933 = vmatpush1.bf16.msra.mxu0 %v864
    %934 = vmatprep.subr.bf16.mxu0 %v870
    %935 = vmatpush1.bf16.msra.mxu0 %v869
    %936 = vmatprep.subr.bf16.mxu0 %v875
    %937 = vmatpush1.bf16.msra.mxu0 %v874
    %938 = vmatprep.subr.bf16.mxu0 %v880
    %939 = vmatpush1.bf16.msra.mxu0 %v879
    %940 = vmatprep.subr.bf16.mxu0 0
    %941 = vmatpush1.bf16.msra.mxu0 0
    %942 = vmatprep.subr.bf16.mxu0 0
    %943 = vmatpush1.bf16.msra.mxu0 0
    %944 = vmatprep.subr.bf16.mxu0 0
    %945 = vmatpush1.bf16.msra.mxu0 0
    %946 = vmatprep.subr.bf16.mxu0 0
    %947 = vmatpush1.bf16.msra.mxu0 0
    %948 = vmatprep.subr.bf16.mxu0 0
    %949 = vmatpush1.bf16.msra.mxu0 0
    %950 = vmatprep.subr.bf16.mxu0 0
    %951 = vmatpush1.bf16.msra.mxu0 0
    %952 = vmatprep.subr.bf16.mxu0 0
    %953 = vmatpush1.bf16.msra.mxu0 0
    %954 = vmatprep.subr.bf16.mxu0 0
    %955 = vmatpush1.bf16.msra.mxu0 0
    %956 = vmatprep.mubr.bf16.mxu0 0
    %957 = vmatmul.mubr.bf16.gmra.mrb[0].mxu0 %v383
    %v958 = vpop.f32.mrb[0].mxu0
    %v959 = vadd.f32 %v629, %v958
    %v960 = vpop.f32.mrb[0].mxu0
    %v961 = vadd.f32 %v631, %v960
    %v962 = vpop.f32.mrb[0].mxu0
    %v963 = vpop.f32.mrb[0].mxu0
    %964 = vdwg.mxu0
    %965 = vmatprep.subr.bf16.mxu0 %v847
    %966 = vmatpush1.bf16.msra.mxu0 %v846
    %967 = vmatprep.subr.bf16.mxu0 %v852
    %968 = vmatpush1.bf16.msra.mxu0 %v851
    %969 = vmatprep.subr.bf16.mxu0 %v857
    %970 = vmatpush1.bf16.msra.mxu0 %v856
    %971 = vmatprep.subr.bf16.mxu0 %v862
    %972 = vmatpush1.bf16.msra.mxu0 %v861
    %973 = vmatprep.subr.bf16.mxu0 %v867
    %974 = vmatpush1.bf16.msra.mxu0 %v866
    %975 = vmatprep.subr.bf16.mxu0 %v872
    %976 = vmatpush1.bf16.msra.mxu0 %v871
    %977 = vmatprep.subr.bf16.mxu0 %v877
    %978 = vmatpush1.bf16.msra.mxu0 %v876
    %979 = vmatprep.subr.bf16.mxu0 %v882
    %980 = vmatpush1.bf16.msra.mxu0 %v881
    %981 = vmatprep.subr.bf16.mxu0 0
    %982 = vmatpush1.bf16.msra.mxu0 0
    %983 = vmatprep.subr.bf16.mxu0 0
    %984 = vmatpush1.bf16.msra.mxu0 0
    %985 = vmatprep.subr.bf16.mxu0 0
    %986 = vmatpush1.bf16.msra.mxu0 0
    %987 = vmatprep.subr.bf16.mxu0 0
    %988 = vmatpush1.bf16.msra.mxu0 0
    %989 = vmatprep.subr.bf16.mxu0 0
    %990 = vmatpush1.bf16.msra.mxu0 0
    %991 = vmatprep.subr.bf16.mxu0 0
    %992 = vmatpush1.bf16.msra.mxu0 0
    %993 = vmatprep.subr.bf16.mxu0 0
    %994 = vmatpush1.bf16.msra.mxu0 0
    %995 = vmatprep.subr.bf16.mxu0 0
    %996 = vmatpush1.bf16.msra.mxu0 0
    %997 = vmatprep.mubr.bf16.mxu0 0
    %998 = vmatmul.mubr.bf16.gmra.mrb[0].mxu0 %v383
    %v999 = vpop.f32.mrb[0].mxu0
    %v1000 = vadd.f32 %v670, %v999
    %v1001 = vpop.f32.mrb[0].mxu0
    %v1002 = vadd.f32 %v672, %v1001
    %v1003 = vpop.f32.mrb[0].mxu0
    %v1004 = vpop.f32.mrb[0].mxu0
    %1005 = vdwg.mxu0
    %1006 = vmatprep.subr.bf16.mxu0 0
    %1007 = vmatpush1.bf16.msra.mxu0 %v848
    %1008 = vmatprep.subr.bf16.mxu0 0
    %1009 = vmatpush1.bf16.msra.mxu0 %v853
    %1010 = vmatprep.subr.bf16.mxu0 0
    %1011 = vmatpush1.bf16.msra.mxu0 %v858
    %1012 = vmatprep.subr.bf16.mxu0 0
    %1013 = vmatpush1.bf16.msra.mxu0 %v863
    %1014 = vmatprep.subr.bf16.mxu0 0
    %1015 = vmatpush1.bf16.msra.mxu0 %v868
    %1016 = vmatprep.subr.bf16.mxu0 0
    %1017 = vmatpush1.bf16.msra.mxu0 %v873
    %1018 = vmatprep.subr.bf16.mxu0 0
    %1019 = vmatpush1.bf16.msra.mxu0 %v878
    %1020 = vmatprep.subr.bf16.mxu0 0
    %1021 = vmatpush1.bf16.msra.mxu0 %v883
    %1022 = vmatprep.subr.bf16.mxu0 0
    %1023 = vmatpush1.bf16.msra.mxu0 0
    %1024 = vmatprep.subr.bf16.mxu0 0
    %1025 = vmatpush1.bf16.msra.mxu0 0
    %1026 = vmatprep.subr.bf16.mxu0 0
    %1027 = vmatpush1.bf16.msra.mxu0 0
    %1028 = vmatprep.subr.bf16.mxu0 0
    %1029 = vmatpush1.bf16.msra.mxu0 0
    %1030 = vmatprep.subr.bf16.mxu0 0
    %1031 = vmatpush1.bf16.msra.mxu0 0
    %1032 = vmatprep.subr.bf16.mxu0 0
    %1033 = vmatpush1.bf16.msra.mxu0 0
    %1034 = vmatprep.subr.bf16.mxu0 0
    %1035 = vmatpush1.bf16.msra.mxu0 0
    %1036 = vmatprep.subr.bf16.mxu0 0
    %1037 = vmatpush1.bf16.msra.mxu0 0
    %1038 = vmatprep.mubr.bf16.mxu0 0
    %1039 = vmatmul.mubr.bf16.gmra.mrb[0].mxu0 %v383
    %v1040 = vpop.f32.mrb[0].mxu0
    %v1041 = vadd.f32 %v711, %v1040
    %v1042 = vpop.f32.mrb[0].mxu0
    %v1043 = vpop.f32.mrb[0].mxu0
    %v1044 = vpop.f32.mrb[0].mxu0
    %1045 = vdwg.mxu0
    %v1047 = vlaneseq
    %v1048 = vshrl.u32 %v1047, 7
    %v1049 = vsub.s32 0, %v1048
    %v1050 = vrot.slane %v353, %v1049
    %v1051 = vlaneseq
    %v1052 = vshrl.u32 %v1051, 7
    %v1053 = vsub.s32 1, %v1052
    %v1054 = vrot.slane %v353, %v1053
    %v1055 = vlaneseq
    %v1056 = vshrl.u32 %v1055, 7
    %v1057 = vsub.s32 2, %v1056
    %v1058 = vrot.slane %v353, %v1057
    %v1059 = vlaneseq
    %v1060 = vshrl.u32 %v1059, 7
    %v1061 = vsub.s32 3, %v1060
    %v1062 = vrot.slane %v353, %v1061
    %v1063 = vlaneseq
    %v1064 = vshrl.u32 %v1063, 7
    %v1065 = vsub.s32 4, %v1064
    %v1066 = vrot.slane %v353, %v1065
    %v1072 = vadd.f32 %v959, %v1050
    %v1073 = vadd.f32 %v961, %v1054
    %v1074 = vadd.f32 %v1000, %v1058
    %v1075 = vadd.f32 %v1002, %v1062
    %v1076 = vadd.f32 %v1041, %v1066
    %v1077 = vxor.u32 %v1072, 2147483648
    %v1078 = vxor.u32 %v1073, 2147483648
    %v1079 = vxor.u32 %v1074, 2147483648
    %v1080 = vxor.u32 %v1075, 2147483648
    %v1081 = vmul.f32 %v1077, 1.442695
    %v1082 = vpow.pop %v1081
    %v1083 = vmul.f32 %v1078, 1.442695
    %v1084 = vpow.pop %v1083
    %v1085 = vmul.f32 %v1079, 1.442695
    %v1086 = vpow.pop %v1085
    %v1087 = vmul.f32 %v1080, 1.442695
    %v1088 = vpow.pop %v1087
    %v1089 = vadd.f32 %v1082, 1.0
    %v1090 = vadd.f32 %v1084, 1.0
    %v1091 = vadd.f32 %v1086, 1.0
    %v1092 = vadd.f32 %v1088, 1.0
    %v1093 = vrcp.pop %v1089
    %v1094 = vmul.f32 1.0, %v1093
    %v1095 = vrcp.pop %v1090
    %v1096 = vmul.f32 1.0, %v1095
    %v1097 = vrcp.pop %v1091
    %v1098 = vmul.f32 1.0, %v1097
    %v1099 = vrcp.pop %v1092
    %v1100 = vmul.f32 1.0, %v1099
    %v1101 = vtanh.pop %v1076
    %v1102 = vmul.f32 %v1094, %v1101
    %v1103 = vld [vmem:[#allocation6] sm:$0xff]
    %v1104 = vmul.f32 %v1098, %v1103
    %v1105 = vadd.f32 %v1102, %v1104
    %v1106 = vld [vmem:[#allocation7] sm:$0xff]
    %v1107 = vmul.f32 %v1100, %v1106
    %v1108 = vadd.f32 %v1105, %v1107
    %v1109 = vtanh.pop %v1108
    %v1110 = vmul.f32 %v1096, %v1109
    %1111 = vst [vmem:[#allocation2 + $0x4] sm:$0x3] %v1108
    %1112 = vst [vmem:[#allocation3 + $0x4] sm:$0x3] %v1110
    %s1113 = sld [smem:[#allocation8 + $0x6]]
    %s1114 = sld [smem:[#allocation12 + $0x6]]
    %s1115 = scalar_lea.vmem [#allocation3], %s1113
    %v1116 = vld [vmem:[%s1115] sm:$0x1]
    %1117 = vst [vmem:[#allocation4] sm:$0x1] %v1116
    %s1118 = scalar_lea.vmem [#allocation3], %s1114
    %v1119 = vld [vmem:[%s1118] sm:$0x1]
    %1120 = vst [vmem:[#allocation5] sm:$0x1] %v1119
    %s1121 = scalar_lea.vmem [#allocation2], %s1113
    %v1122 = vld [vmem:[%s1121] sm:$0x1]
    %1123 = vst [vmem:[#allocation6] sm:$0x1] %v1122
    %s1124 = scalar_lea.vmem [#allocation2], %s1114
    %v1125 = vld [vmem:[%s1124] sm:$0x1]
    %1126 = vst [vmem:[#allocation7] sm:$0x1] %v1125
    %v1127 = vld [vmem:[#allocation4] sm:$0xff]
    %v1128 = vpack.c.bf16 %v1127, %v1127
    %v1129 = vld [vmem:[#allocation5] sm:$0xff]
    %v1130 = vpack.c.bf16 %v1129, %v1129
    %1131 = vmatprep.subr.bf16.mxu0 %v515
    %1132 = vmatpush1.bf16.msra.mxu0 %v514
    %1133 = vmatprep.subr.bf16.mxu0 %v520
    %1134 = vmatpush1.bf16.msra.mxu0 %v519
    %1135 = vmatprep.subr.bf16.mxu0 %v525
    %1136 = vmatpush1.bf16.msra.mxu0 %v524
    %1137 = vmatprep.subr.bf16.mxu0 %v530
    %1138 = vmatpush1.bf16.msra.mxu0 %v529
    %1139 = vmatprep.subr.bf16.mxu0 %v535
    %1140 = vmatpush1.bf16.msra.mxu0 %v534
    %1141 = vmatprep.subr.bf16.mxu0 %v540
    %1142 = vmatpush1.bf16.msra.mxu0 %v539
    %1143 = vmatprep.subr.bf16.mxu0 %v545
    %1144 = vmatpush1.bf16.msra.mxu0 %v544
    %1145 = vmatprep.subr.bf16.mxu0 %v550
    %1146 = vmatpush1.bf16.msra.mxu0 %v549
    %1147 = vmatprep.subr.bf16.mxu0 0
    %1148 = vmatpush1.bf16.msra.mxu0 0
    %1149 = vmatprep.subr.bf16.mxu0 0
    %1150 = vmatpush1.bf16.msra.mxu0 0
    %1151 = vmatprep.subr.bf16.mxu0 0
    %1152 = vmatpush1.bf16.msra.mxu0 0
    %1153 = vmatprep.subr.bf16.mxu0 0
    %1154 = vmatpush1.bf16.msra.mxu0 0
    %1155 = vmatprep.subr.bf16.mxu0 0
    %1156 = vmatpush1.bf16.msra.mxu0 0
    %1157 = vmatprep.subr.bf16.mxu0 0
    %1158 = vmatpush1.bf16.msra.mxu0 0
    %1159 = vmatprep.subr.bf16.mxu0 0
    %1160 = vmatpush1.bf16.msra.mxu0 0
    %1161 = vmatprep.subr.bf16.mxu0 0
    %1162 = vmatpush1.bf16.msra.mxu0 0
    %1163 = vmatprep.mubr.bf16.mxu0 0
    %1164 = vmatmul.mubr.bf16.gmra.mrb[0].mxu0 %v1130
    %v1165 = vpop.f32.mrb[0].mxu0
    %v1166 = vadd.f32 0.0, %v1165
    %v1167 = vpop.f32.mrb[0].mxu0
    %v1168 = vadd.f32 0.0, %v1167
    %v1169 = vpop.f32.mrb[0].mxu0
    %v1170 = vpop.f32.mrb[0].mxu0
    %1171 = vdwg.mxu0
    %1172 = vmatprep.subr.bf16.mxu0 %v517
    %1173 = vmatpush1.bf16.msra.mxu0 %v516
    %1174 = vmatprep.subr.bf16.mxu0 %v522
    %1175 = vmatpush1.bf16.msra.mxu0 %v521
    %1176 = vmatprep.subr.bf16.mxu0 %v527
    %1177 = vmatpush1.bf16.msra.mxu0 %v526
    %1178 = vmatprep.subr.bf16.mxu0 %v532
    %1179 = vmatpush1.bf16.msra.mxu0 %v531
    %1180 = vmatprep.subr.bf16.mxu0 %v537
    %1181 = vmatpush1.bf16.msra.mxu0 %v536
    %1182 = vmatprep.subr.bf16.mxu0 %v542
    %1183 = vmatpush1.bf16.msra.mxu0 %v541
    %1184 = vmatprep.subr.bf16.mxu0 %v547
    %1185 = vmatpush1.bf16.msra.mxu0 %v546
    %1186 = vmatprep.subr.bf16.mxu0 %v552
    %1187 = vmatpush1.bf16.msra.mxu0 %v551
    %1188 = vmatprep.subr.bf16.mxu0 0
    %1189 = vmatpush1.bf16.msra.mxu0 0
    %1190 = vmatprep.subr.bf16.mxu0 0
    %1191 = vmatpush1.bf16.msra.mxu0 0
    %1192 = vmatprep.subr.bf16.mxu0 0
    %1193 = vmatpush1.bf16.msra.mxu0 0
    %1194 = vmatprep.subr.bf16.mxu0 0
    %1195 = vmatpush1.bf16.msra.mxu0 0
    %1196 = vmatprep.subr.bf16.mxu0 0
    %1197 = vmatpush1.bf16.msra.mxu0 0
    %1198 = vmatprep.subr.bf16.mxu0 0
    %1199 = vmatpush1.bf16.msra.mxu0 0
    %1200 = vmatprep.subr.bf16.mxu0 0
    %1201 = vmatpush1.bf16.msra.mxu0 0
    %1202 = vmatprep.subr.bf16.mxu0 0
    %1203 = vmatpush1.bf16.msra.mxu0 0
    %1204 = vmatprep.mubr.bf16.mxu0 0
    %1205 = vmatmul.mubr.bf16.gmra.mrb[0].mxu0 %v1130
    %v1206 = vpop.f32.mrb[0].mxu0
    %v1207 = vadd.f32 0.0, %v1206
    %v1208 = vpop.f32.mrb[0].mxu0
    %v1209 = vadd.f32 0.0, %v1208
    %v1210 = vpop.f32.mrb[0].mxu0
    %v1211 = vpop.f32.mrb[0].mxu0
    %1212 = vdwg.mxu0
    %1213 = vmatprep.subr.bf16.mxu0 0
    %1214 = vmatpush1.bf16.msra.mxu0 %v518
    %1215 = vmatprep.subr.bf16.mxu0 0
    %1216 = vmatpush1.bf16.msra.mxu0 %v523
    %1217 = vmatprep.subr.bf16.mxu0 0
    %1218 = vmatpush1.bf16.msra.mxu0 %v528
    %1219 = vmatprep.subr.bf16.mxu0 0
    %1220 = vmatpush1.bf16.msra.mxu0 %v533
    %1221 = vmatprep.subr.bf16.mxu0 0
    %1222 = vmatpush1.bf16.msra.mxu0 %v538
    %1223 = vmatprep.subr.bf16.mxu0 0
    %1224 = vmatpush1.bf16.msra.mxu0 %v543
    %1225 = vmatprep.subr.bf16.mxu0 0
    %1226 = vmatpush1.bf16.msra.mxu0 %v548
    %1227 = vmatprep.subr.bf16.mxu0 0
    %1228 = vmatpush1.bf16.msra.mxu0 %v553
    %1229 = vmatprep.subr.bf16.mxu0 0
    %1230 = vmatpush1.bf16.msra.mxu0 0
    %1231 = vmatprep.subr.bf16.mxu0 0
    %1232 = vmatpush1.bf16.msra.mxu0 0
    %1233 = vmatprep.subr.bf16.mxu0 0
    %1234 = vmatpush1.bf16.msra.mxu0 0
    %1235 = vmatprep.subr.bf16.mxu0 0
    %1236 = vmatpush1.bf16.msra.mxu0 0
    %1237 = vmatprep.subr.bf16.mxu0 0
    %1238 = vmatpush1.bf16.msra.mxu0 0
    %1239 = vmatprep.subr.bf16.mxu0 0
    %1240 = vmatpush1.bf16.msra.mxu0 0
    %1241 = vmatprep.subr.bf16.mxu0 0
    %1242 = vmatpush1.bf16.msra.mxu0 0
    %1243 = vmatprep.subr.bf16.mxu0 0
    %1244 = vmatpush1.bf16.msra.mxu0 0
    %1245 = vmatprep.mubr.bf16.mxu0 0
    %1246 = vmatmul.mubr.bf16.gmra.mrb[0].mxu0 %v1130
    %v1247 = vpop.f32.mrb[0].mxu0
    %v1248 = vadd.f32 0.0, %v1247
    %v1249 = vpop.f32.mrb[0].mxu0
    %v1250 = vpop.f32.mrb[0].mxu0
    %v1251 = vpop.f32.mrb[0].mxu0
    %1252 = vdwg.mxu0
    %1253 = vmatprep.subr.bf16.mxu0 %v845
    %1254 = vmatpush1.bf16.msra.mxu0 %v844
    %1255 = vmatprep.subr.bf16.mxu0 %v850
    %1256 = vmatpush1.bf16.msra.mxu0 %v849
    %1257 = vmatprep.subr.bf16.mxu0 %v855
    %1258 = vmatpush1.bf16.msra.mxu0 %v854
    %1259 = vmatprep.subr.bf16.mxu0 %v860
    %1260 = vmatpush1.bf16.msra.mxu0 %v859
    %1261 = vmatprep.subr.bf16.mxu0 %v865
    %1262 = vmatpush1.bf16.msra.mxu0 %v864
    %1263 = vmatprep.subr.bf16.mxu0 %v870
    %1264 = vmatpush1.bf16.msra.mxu0 %v869
    %1265 = vmatprep.subr.bf16.mxu0 %v875
    %1266 = vmatpush1.bf16.msra.mxu0 %v874
    %1267 = vmatprep.subr.bf16.mxu0 %v880
    %1268 = vmatpush1.bf16.msra.mxu0 %v879
    %1269 = vmatprep.subr.bf16.mxu0 0
    %1270 = vmatpush1.bf16.msra.mxu0 0
    %1271 = vmatprep.subr.bf16.mxu0 0
    %1272 = vmatpush1.bf16.msra.mxu0 0
    %1273 = vmatprep.subr.bf16.mxu0 0
    %1274 = vmatpush1.bf16.msra.mxu0 0
    %1275 = vmatprep.subr.bf16.mxu0 0
    %1276 = vmatpush1.bf16.msra.mxu0 0
    %1277 = vmatprep.subr.bf16.mxu0 0
    %1278 = vmatpush1.bf16.msra.mxu0 0
    %1279 = vmatprep.subr.bf16.mxu0 0
    %1280 = vmatpush1.bf16.msra.mxu0 0
    %1281 = vmatprep.subr.bf16.mxu0 0
    %1282 = vmatpush1.bf16.msra.mxu0 0
    %1283 = vmatprep.subr.bf16.mxu0 0
    %1284 = vmatpush1.bf16.msra.mxu0 0
    %1285 = vmatprep.mubr.bf16.mxu0 0
    %1286 = vmatmul.mubr.bf16.gmra.mrb[0].mxu0 %v1128
    %v1287 = vpop.f32.mrb[0].mxu0
    %v1288 = vadd.f32 %v1166, %v1287
    %v1289 = vpop.f32.mrb[0].mxu0
    %v1290 = vadd.f32 %v1168, %v1289
    %v1291 = vpop.f32.mrb[0].mxu0
    %v1292 = vpop.f32.mrb[0].mxu0
    %1293 = vdwg.mxu0
    %1294 = vmatprep.subr.bf16.mxu0 %v847
    %1295 = vmatpush1.bf16.msra.mxu0 %v846
    %1296 = vmatprep.subr.bf16.mxu0 %v852
    %1297 = vmatpush1.bf16.msra.mxu0 %v851
    %1298 = vmatprep.subr.bf16.mxu0 %v857
    %1299 = vmatpush1.bf16.msra.mxu0 %v856
    %1300 = vmatprep.subr.bf16.mxu0 %v862
    %1301 = vmatpush1.bf16.msra.mxu0 %v861
    %1302 = vmatprep.subr.bf16.mxu0 %v867
    %1303 = vmatpush1.bf16.msra.mxu0 %v866
    %1304 = vmatprep.subr.bf16.mxu0 %v872
    %1305 = vmatpush1.bf16.msra.mxu0 %v871
    %1306 = vmatprep.subr.bf16.mxu0 %v877
    %1307 = vmatpush1.bf16.msra.mxu0 %v876
    %1308 = vmatprep.subr.bf16.mxu0 %v882
    %1309 = vmatpush1.bf16.msra.mxu0 %v881
    %1310 = vmatprep.subr.bf16.mxu0 0
    %1311 = vmatpush1.bf16.msra.mxu0 0
    %1312 = vmatprep.subr.bf16.mxu0 0
    %1313 = vmatpush1.bf16.msra.mxu0 0
    %1314 = vmatprep.subr.bf16.mxu0 0
    %1315 = vmatpush1.bf16.msra.mxu0 0
    %1316 = vmatprep.subr.bf16.mxu0 0
    %1317 = vmatpush1.bf16.msra.mxu0 0
    %1318 = vmatprep.subr.bf16.mxu0 0
    %1319 = vmatpush1.bf16.msra.mxu0 0
    %1320 = vmatprep.subr.bf16.mxu0 0
    %1321 = vmatpush1.bf16.msra.mxu0 0
    %1322 = vmatprep.subr.bf16.mxu0 0
    %1323 = vmatpush1.bf16.msra.mxu0 0
    %1324 = vmatprep.subr.bf16.mxu0 0
    %1325 = vmatpush1.bf16.msra.mxu0 0
    %1326 = vmatprep.mubr.bf16.mxu0 0
    %1327 = vmatmul.mubr.bf16.gmra.mrb[0].mxu0 %v1128
    %v1328 = vpop.f32.mrb[0].mxu0
    %v1329 = vadd.f32 %v1207, %v1328
    %v1330 = vpop.f32.mrb[0].mxu0
    %v1331 = vadd.f32 %v1209, %v1330
    %v1332 = vpop.f32.mrb[0].mxu0
    %v1333 = vpop.f32.mrb[0].mxu0
    %1334 = vdwg.mxu0
    %1335 = vmatprep.subr.bf16.mxu0 0
    %1336 = vmatpush1.bf16.msra.mxu0 %v848
    %1337 = vmatprep.subr.bf16.mxu0 0
    %1338 = vmatpush1.bf16.msra.mxu0 %v853
    %1339 = vmatprep.subr.bf16.mxu0 0
    %1340 = vmatpush1.bf16.msra.mxu0 %v858
    %1341 = vmatprep.subr.bf16.mxu0 0
    %1342 = vmatpush1.bf16.msra.mxu0 %v863
    %1343 = vmatprep.subr.bf16.mxu0 0
    %1344 = vmatpush1.bf16.msra.mxu0 %v868
    %1345 = vmatprep.subr.bf16.mxu0 0
    %1346 = vmatpush1.bf16.msra.mxu0 %v873
    %1347 = vmatprep.subr.bf16.mxu0 0
    %1348 = vmatpush1.bf16.msra.mxu0 %v878
    %1349 = vmatprep.subr.bf16.mxu0 0
    %1350 = vmatpush1.bf16.msra.mxu0 %v883
    %1351 = vmatprep.subr.bf16.mxu0 0
    %1352 = vmatpush1.bf16.msra.mxu0 0
    %1353 = vmatprep.subr.bf16.mxu0 0
    %1354 = vmatpush1.bf16.msra.mxu0 0
    %1355 = vmatprep.subr.bf16.mxu0 0
    %1356 = vmatpush1.bf16.msra.mxu0 0
    %1357 = vmatprep.subr.bf16.mxu0 0
    %1358 = vmatpush1.bf16.msra.mxu0 0
    %1359 = vmatprep.subr.bf16.mxu0 0
    %1360 = vmatpush1.bf16.msra.mxu0 0
    %1361 = vmatprep.subr.bf16.mxu0 0
    %1362 = vmatpush1.bf16.msra.mxu0 0
    %1363 = vmatprep.subr.bf16.mxu0 0
    %1364 = vmatpush1.bf16.msra.mxu0 0
    %1365 = vmatprep.subr.bf16.mxu0 0
    %1366 = vmatpush1.bf16.msra.mxu0 0
    %1367 = vmatprep.mubr.bf16.mxu0 0
    %1368 = vmatmul.mubr.bf16.gmra.mrb[0].mxu0 %v1128
    %v1369 = vpop.f32.mrb[0].mxu0
    %v1370 = vadd.f32 %v1248, %v1369
    %v1371 = vpop.f32.mrb[0].mxu0
    %v1372 = vpop.f32.mrb[0].mxu0
    %v1373 = vpop.f32.mrb[0].mxu0
    %1374 = vdwg.mxu0
    %v1375 = vadd.f32 %v1288, %v1050
    %v1376 = vadd.f32 %v1290, %v1054
    %v1377 = vadd.f32 %v1329, %v1058
    %v1378 = vadd.f32 %v1331, %v1062
    %v1379 = vadd.f32 %v1370, %v1066
    %v1380 = vxor.u32 %v1375, 2147483648
    %v1381 = vxor.u32 %v1376, 2147483648
    %v1382 = vxor.u32 %v1377, 2147483648
    %v1383 = vxor.u32 %v1378, 2147483648
    %v1384 = vmul.f32 %v1380, 1.442695
    %v1385 = vpow.pop %v1384
    %v1386 = vmul.f32 %v1381, 1.442695
    %v1387 = vpow.pop %v1386
    %v1388 = vmul.f32 %v1382, 1.442695
    %v1389 = vpow.pop %v1388
    %v1390 = vmul.f32 %v1383, 1.442695
    %v1391 = vpow.pop %v1390
    %v1392 = vadd.f32 %v1385, 1.0
    %v1393 = vadd.f32 %v1387, 1.0
    %v1394 = vadd.f32 %v1389, 1.0
    %v1395 = vadd.f32 %v1391, 1.0
    %v1396 = vrcp.pop %v1392
    %v1397 = vmul.f32 1.0, %v1396
    %v1398 = vrcp.pop %v1393
    %v1399 = vmul.f32 1.0, %v1398
    %v1400 = vrcp.pop %v1394
    %v1401 = vmul.f32 1.0, %v1400
    %v1402 = vrcp.pop %v1395
    %v1403 = vmul.f32 1.0, %v1402
    %v1404 = vtanh.pop %v1379
    %v1405 = vmul.f32 %v1397, %v1404
    %v1406 = vld [vmem:[#allocation6] sm:$0xff]
    %v1407 = vmul.f32 %v1401, %v1406
    %v1408 = vadd.f32 %v1405, %v1407
    %v1409 = vld [vmem:[#allocation7] sm:$0xff]
    %v1410 = vmul.f32 %v1403, %v1409
    %v1411 = vadd.f32 %v1408, %v1410
    %v1412 = vtanh.pop %v1411
    %v1413 = vmul.f32 %v1399, %v1412
    %1414 = vst [vmem:[#allocation2 + $0x6] sm:$0x1] %v1411
    %1415 = vst [vmem:[#allocation3 + $0x6] sm:$0x1] %v1413
    %v1416 = vld [vmem:[#allocation3] sm:$0xff]
    %v1417 = vpack.c.bf16 %v1416, %v1416
    %v1418 = vld [vmem:[%s9] sm:$0xf]
    %v1419 = vld [vmem:[%s9 + $0x4] sm:$0xf]
    %v1420 = vld [vmem:[%s9 + $0x8] sm:$0xf]
    %v1421 = vld [vmem:[%s9 + $0xc] sm:$0xf]
    %v1422 = vld [vmem:[%s9 + $0x10] sm:$0xf]
    %v1423 = vld [vmem:[%s9 + $0x14] sm:$0xf]
    %v1424 = vld [vmem:[%s9 + $0x18] sm:$0xf]
    %v1425 = vld [vmem:[%s9 + $0x1c] sm:$0xf]
    %v1426 = vld [vmem:[%s9 + $0x20] sm:$0xf]
    %v1427 = vld [vmem:[%s9 + $0x24] sm:$0xf]
    %v1428 = vld [vmem:[%s9 + $0x28] sm:$0xf]
    %v1429 = vld [vmem:[%s9 + $0x2c] sm:$0xf]
    %v1430 = vld [vmem:[%s9 + $0x30] sm:$0xf]
    %v1431 = vld [vmem:[%s9 + $0x34] sm:$0xf]
    %v1432 = vld [vmem:[%s9 + $0x38] sm:$0xf]
    %v1433 = vld [vmem:[%s9 + $0x3c] sm:$0xf]
    %v1434 = vld [vmem:[#allocation17] sm:$0x1]
    %v1436 = vlaneseq
    %v1437 = vshrl.u32 %v1436, 7
    %v1438 = vsub.s32 0, %v1437
    %v1439 = vrot.slane %v1434, %v1438
    %v1457 = vunpack.c.l.b16 %v1418
    %v1458 = vunpack.c.l.b16 %v1419
    %v1459 = vunpack.c.l.b16 %v1420
    %v1460 = vunpack.c.l.b16 %v1421
    %v1461 = vunpack.c.l.b16 %v1422
    %v1462 = vunpack.c.l.b16 %v1423
    %v1463 = vunpack.c.l.b16 %v1424
    %v1464 = vunpack.c.l.b16 %v1425
    %v1465 = vunpack.c.l.b16 %v1426
    %v1466 = vunpack.c.l.b16 %v1427
    %v1467 = vunpack.c.l.b16 %v1428
    %v1468 = vunpack.c.l.b16 %v1429
    %v1469 = vunpack.c.l.b16 %v1430
    %v1470 = vunpack.c.l.b16 %v1431
    %v1471 = vunpack.c.l.b16 %v1432
    %v1472 = vunpack.c.l.b16 %v1433
    %v1473 = vpack.c.b16 %v1458, %v1457
    %v1474 = vpack.c.b16 %v1460, %v1459
    %v1475 = vpack.c.b16 %v1462, %v1461
    %v1476 = vpack.c.b16 %v1464, %v1463
    %v1477 = vpack.c.b16 %v1466, %v1465
    %v1478 = vpack.c.b16 %v1468, %v1467
    %v1479 = vpack.c.b16 %v1470, %v1469
    %v1480 = vpack.c.b16 %v1472, %v1471
    %1489 = vmatprep.subr.bf16.mxu0 0
    %1490 = vmatpush1.bf16.msra.mxu0 %v1473
    %1491 = vmatprep.subr.bf16.mxu0 0
    %1492 = vmatpush1.bf16.msra.mxu0 %v1474
    %1493 = vmatprep.subr.bf16.mxu0 0
    %1494 = vmatpush1.bf16.msra.mxu0 %v1475
    %1495 = vmatprep.subr.bf16.mxu0 0
    %1496 = vmatpush1.bf16.msra.mxu0 %v1476
    %1497 = vmatprep.subr.bf16.mxu0 0
    %1498 = vmatpush1.bf16.msra.mxu0 %v1477
    %1499 = vmatprep.subr.bf16.mxu0 0
    %1500 = vmatpush1.bf16.msra.mxu0 %v1478
    %1501 = vmatprep.subr.bf16.mxu0 0
    %1502 = vmatpush1.bf16.msra.mxu0 %v1479
    %1503 = vmatprep.subr.bf16.mxu0 0
    %1504 = vmatpush1.bf16.msra.mxu0 %v1480
    %1505 = vmatprep.subr.bf16.mxu0 0
    %1506 = vmatpush1.bf16.msra.mxu0 0
    %1507 = vmatprep.subr.bf16.mxu0 0
    %1508 = vmatpush1.bf16.msra.mxu0 0
    %1509 = vmatprep.subr.bf16.mxu0 0
    %1510 = vmatpush1.bf16.msra.mxu0 0
    %1511 = vmatprep.subr.bf16.mxu0 0
    %1512 = vmatpush1.bf16.msra.mxu0 0
    %1513 = vmatprep.subr.bf16.mxu0 0
    %1514 = vmatpush1.bf16.msra.mxu0 0
    %1515 = vmatprep.subr.bf16.mxu0 0
    %1516 = vmatpush1.bf16.msra.mxu0 0
    %1517 = vmatprep.subr.bf16.mxu0 0
    %1518 = vmatpush1.bf16.msra.mxu0 0
    %1519 = vmatprep.subr.bf16.mxu0 0
    %1520 = vmatpush1.bf16.msra.mxu0 0
    %1521 = vmatprep.mubr.bf16.mxu0 0
    %1522 = vmatmul.mubr.bf16.gmra.mrb[0].mxu0 %v1417
    %v1523 = vpop.f32.mrb[0].mxu0
    %v1524 = vadd.f32 %v1439, %v1523
    %v1525 = vpop.f32.mrb[0].mxu0
    %v1526 = vpop.f32.mrb[0].mxu0
    %v1527 = vpop.f32.mrb[0].mxu0
    %1528 = vdwg.mxu0
    %1529 = vmax.xlane.f32.xlu0 %v1524
    %v1530 = vpop.xlane.xlu0 %1529
    %v1531 = vsub.f32 %v1524, %v1530
    %v1532 = vmul.f32 %v1531, 1.442695
    %v1533 = vpow.pop %v1532
    %1534 = vadd.xlane.f32.xlu0 %v1533
    %v1535 = vpop.xlane.xlu0 %1534
    %v1536 = vlog2.pop %v1535
    %v1537 = vmul.f32 %v1536, 0.6931472
    %v1538 = vadd.f32 %v1530, %v1537
    %v1539 = vsub.f32 %v1524, %v1538
    %1540 = vst [vmem:[#allocation18] sm:$0xff] %v1539
    %v1541 = vlaneseq
    %v1542 = vand.u32 %v1541, 127
    %v1543 = vld [vmem:[%s2] sm:$0xff]
    %1544 = vset.pattern.permute.xlu0 0
    %1545 = vperm.xlu0 %1544, %v1543
    %v1546 = vpop.permute.xlu0 %1545
    %vm1547 = vcmp.eq.s32.totalorder %v1542, %v1546
    %v1548 = vsel %vm1547, %v1539, 0.0
    %1549 = vadd.xlane.f32.xlu0 %v1548
    %v1550 = vpop.xlane.xlu0 %1549
    %v1551 = vrot.slane %v1550, 4
    %v1552 = vadd.f32 %v1550, %v1551
    %v1553 = vrot.slane %v1552, 2
    %v1554 = vadd.f32 %v1552, %v1553
    %v1555 = vrot.slane %v1554, 1
    %v1556 = vadd.f32 %v1554, %v1555
    %s1557 = vtos %v1556
    %v1558 = vstv %s1557
    %v1559 = vsub.f32 0.0, %v1558
    %vm1560 = vcmask 0
    %1561 = vst.msk [vmem:[#allocation19] sm:$0x1] %vm1560, %v1559
    // Predicated region
    $region66: #{_forward_impl.1} parent=1 // pred_check
      _
    $region67: #{_forward_impl.1} parent=1 // pred_check_branch
      %1563 = sbr.rel (0) target = $region69
    $region68: #{_forward_impl.1} parent=1 // pred_region
      %s1565 = ssub.s32 128, 128
      %1566 = vsyncadd [#allocation10], %s1565
      %s1568 = sshll.u32 [#allocation18], 4
      %s1569 = int_to_ptr.vmem [resolvable:$true] %s1568
      %1571 = dma.vmem_to_hbm [thread:$0]  %s1569, 128, %s11, [#allocation10]
    $region69: #{_forward_impl.1} parent=1 // pred_fallthru
      _
    // Predicated region
    $region70: #{_forward_impl.1} parent=1 // pred_check
      _
    $region71: #{_forward_impl.1} parent=1 // pred_check_branch
      %1573 = sbr.rel (0) target = $region73
    $region72: #{_forward_impl.1} parent=1 // pred_region
      %s1575 = ssub.s32 16, 16
      %1576 = vsyncadd [#allocation20], %s1575
      %s1578 = sshll.u32 [#allocation19], 4
      %s1579 = int_to_ptr.vmem [resolvable:$true] %s1578
      %1581 = dma.vmem_to_hbm [thread:$0]  %s1579, 16, %s12, [#allocation20]
    $region73: #{_forward_impl.1} parent=1 // pred_fallthru
      _
    // Predicated region
    $region74: #{_forward_impl.1} parent=1 // pred_check
      _
    $region75: #{_forward_impl.1} parent=1 // pred_check_branch
      %1583 = sbr.rel (0) target = $region77
    $region76: #{_forward_impl.1} parent=1 // pred_region
      %1584 = dma.done [#allocation10], 128
    $region77: #{_forward_impl.1} parent=1 // pred_fallthru
      _
    // Predicated region
    $region78: #{_forward_impl.1} parent=1 // pred_check
      _
    $region79: #{_forward_impl.1} parent=1 // pred_check_branch
      %1586 = sbr.rel (0) target = $region81
    $region80: #{_forward_impl.1} parent=1 // pred_region
      %1587 = dma.done [#allocation20], 16
    $region81: #{_forward_impl.1} parent=1 // pred_fallthru
      _
    %1588 = vsyncpa [#allocation9], 1
    %1589 = vsyncpa [#allocation16], 1
    %1590 = vsyncpa [#allocation10], 1
    %1591 = vsyncpa [#allocation20], 1
    %1592 = vsyncpa [#allocation11], 1
    %1593 = vsyncpa [#allocation13], 1

</llo_original>
